<compile_context>
chip_gen: v7x
topology: tpu7x:2x2x1
jax: 0.10.0
libtpu: 0.0.40
codegen_flags: <defaults>
</compile_context>

<pallas_src>
import functools

import jax
import jax.numpy as jnp
from jax.experimental import pallas as pl
from jax.experimental.pallas import tpu as pltpu


def _round_up(x, m):
    return ((x + m - 1) // m) * m


def _grid_encoder_kernel(x_ref, w1_ref, b1_ref, w2_ref, b2_ref, o_ref,
                         rhs_ref, h_ref, *,
                         D, H, W, plane, Wrow, S, LC, i0, Cp, Chp):
    """Fused Conv3d+ReLU -> Conv3d+ReLU for one batch element.

    x_ref  : (1, Cp, NBUF)    f32  zero-margin, spatially-flattened padded input
    w1_ref : (Chp, 27*Cp)     bf16 conv1 weights, tap-major columns (t*Cp + c)
    b1_ref : (Chp, LC)        f32  conv1 bias, pre-broadcast over lanes
    w2_ref : (Cop, 27*Chp)    bf16 conv2 weights, tap-major columns
    b2_ref : (Cop, LC)        f32  conv2 bias, pre-broadcast over lanes
    o_ref  : (1, Cop, LC)     f32  conv2 output over flat positions [S, S+LC)
    rhs_ref: (max(K1,K2), LC) f32  scratch: sublane-stacked im2col RHS
    h_ref  : (Chp, NBUF)      f32  scratch: re-padded conv1 output
    """
    NBUF = h_ref.shape[1]
    K1 = 27 * Cp
    K2 = 27 * Chp
    offs = [(kd - 1) * plane + (kh - 1) * Wrow + (kw - 1)
            for kd in range(3) for kh in range(3) for kw in range(3)]

    # ---- layer 1: build im2col RHS (27 sublane-aligned slab copies), then a
    #      single bf16 MXU matmul with f32 accumulation. ----
    for t, off in enumerate(offs):
        rhs_ref[pl.ds(t * Cp, Cp), :] = x_ref[0, :, pl.ds(S + off, LC)]
    acc1 = jnp.dot(w1_ref[...],
                   rhs_ref[pl.ds(0, K1), :].astype(jnp.bfloat16),
                   preferred_element_type=jnp.float32)
    h1 = jnp.maximum(acc1 + b1_ref[...], 0.0)

    # Interior mask (zero conv-halo / tail lanes), computed in-kernel from an
    # iota with float floor-division (no DMA'd mask input, no int vector div).
    pos = (jax.lax.broadcasted_iota(jnp.int32, (1, LC), 1)
           .astype(jnp.float32) + float(i0))
    d_i = jnp.floor((pos + 0.5) * (1.0 / plane))
    r_i = pos - d_i * plane
    h_i = jnp.floor((r_i + 0.5) * (1.0 / Wrow))
    w_i = r_i - h_i * Wrow
    interior = ((d_i >= 1.0) & (d_i <= float(D))
                & (h_i >= 1.0) & (h_i <= float(H))
                & (w_i >= 1.0) & (w_i <= float(W)))
    h1 = jnp.where(interior, h1, 0.0)

    # ---- re-pad intermediate in VMEM: zero only the two margin stripes, the
    #      interior [S, S+LC) is fully overwritten every step. ----
    h_ref[:, pl.ds(0, S)] = jnp.zeros((Chp, S), jnp.float32)
    h_ref[:, pl.ds(S + LC, NBUF - S - LC)] = jnp.zeros(
        (Chp, NBUF - S - LC), jnp.float32)
    h_ref[:, pl.ds(S, LC)] = h1

    # ---- layer 2: im2col RHS build + single matmul + bias + ReLU ----
    for t, off in enumerate(offs):
        rhs_ref[pl.ds(t * Chp, Chp), :] = h_ref[:, pl.ds(S + off, LC)]
    acc2 = jnp.dot(w2_ref[...],
                   rhs_ref[pl.ds(0, K2), :].astype(jnp.bfloat16),
                   preferred_element_type=jnp.float32)
    o_ref[0] = jnp.maximum(acc2 + b2_ref[...], 0.0)


def grid_encoder_forward(x, w1, b1, w2, b2):
    """Mirrors GridEncoder.forward.

    x : (B, T, C, H, W)  module input layout
    w1: (Chid, Cin, 3, 3, 3), b1: (Chid,)     PyTorch Conv3d weight layout
    w2: (Cout, Chid, 3, 3, 3), b2: (Cout,)
    returns (B, Cout, T, H, W)   (NCDHW, matching the PyTorch module)
    """
    B, T, C, H, W = x.shape
    D = T
    chid, cout = w1.shape[0], w2.shape[0]
    Cp = _round_up(C, 8)          # sublane-aligned slab height, layer 1
    Chp = _round_up(chid, 8)      # sublane-aligned slab height, layer 2
    Cop = _round_up(cout, 8)
    K1, K2 = 27 * Cp, 27 * Chp

    Dp, Hpd, Wpd = D + 2, H + 2, W + 2
    plane = Hpd * Wpd
    nvol = Dp * plane
    i0 = plane + Wpd + 1                  # flat index of first interior voxel
    i1 = D * plane + H * Wpd + W          # flat index of last interior voxel
    LC = _round_up(i1 - i0 + 1, 128)      # lane-aligned compute width
    S = _round_up(i0, 128)                # compute range starts lane-aligned
    OFF = S - i0                          # padded volume placed at offset OFF
    NBUF = _round_up(S + LC + i0, 128)    # room for the widest tap shift

    f32, bf16 = jnp.float32, jnp.bfloat16

    # (B,T,C,H,W) -> NCDHW -> pad channels to Cp, spatial by 1 -> flatten ->
    # add zero margins so every tap shift is an in-bounds lane slice.
    xc = jnp.transpose(x, (0, 2, 1, 3, 4)).astype(f32)
    xp = jnp.pad(xc, ((0, 0), (0, Cp - C), (1, 1), (1, 1), (1, 1)))
    xf = jnp.pad(xp.reshape(B, Cp, nvol),
                 ((0, 0), (0, 0), (OFF, NBUF - OFF - nvol)))

    # Lane-dense tap-major weight slabs: column index = t*Cp + c with
    # t = kd*9 + kh*3 + kw.  bf16 operands, f32 accumulation in the kernel.
    w1t = jnp.transpose(w1, (2, 3, 4, 1, 0)).astype(f32)        # (3,3,3,C,chid)
    w1t = jnp.pad(w1t, ((0, 0), (0, 0), (0, 0), (0, Cp - C), (0, Chp - chid)))
    w1k = w1t.reshape(K1, Chp).T.astype(bf16)                   # (Chp, K1)
    w2t = jnp.transpose(w2, (2, 3, 4, 1, 0)).astype(f32)        # (3,3,3,chid,cout)
    w2t = jnp.pad(w2t, ((0, 0), (0, 0), (0, 0), (0, Chp - chid), (0, Cop - cout)))
    w2k = w2t.reshape(K2, Cop).T.astype(bf16)                   # (Cop, K2)

    # Pre-broadcast biases to lane-dense slabs (plain VPU add in the kernel).
    b1k = jnp.broadcast_to(
        jnp.pad(b1.astype(f32), (0, Chp - chid))[:, None], (Chp, LC))
    b2k = jnp.broadcast_to(
        jnp.pad(b2.astype(f32), (0, Cop - cout))[:, None], (Cop, LC))

    kernel = functools.partial(_grid_encoder_kernel,
                               D=D, H=H, W=W, plane=plane, Wrow=Wpd,
                               S=S, LC=LC, i0=i0, Cp=Cp, Chp=Chp)

    cost = pl.CostEstimate(
        flops=2 * B * LC * (K1 * Chp + K2 * Cop),
        transcendentals=0,
        bytes_accessed=(B * Cp * NBUF * 4 + Chp * K1 * 2 + Cop * K2 * 2
                        + Chp * LC * 4 + Cop * LC * 4 + B * Cop * LC * 4))

    y_flat = pl.pallas_call(
        kernel,
        out_shape=jax.ShapeDtypeStruct((B, Cop, LC), f32),
        grid_spec=pltpu.PrefetchScalarGridSpec(
            num_scalar_prefetch=0,
            grid=(B,),
            in_specs=[
                pl.BlockSpec((1, Cp, NBUF), lambda b: (b, 0, 0)),
                pl.BlockSpec((Chp, K1), lambda b: (0, 0)),
                pl.BlockSpec((Chp, LC), lambda b: (0, 0)),
                pl.BlockSpec((Cop, K2), lambda b: (0, 0)),
                pl.BlockSpec((Cop, LC), lambda b: (0, 0)),
            ],
            out_specs=pl.BlockSpec((1, Cop, LC), lambda b: (b, 0, 0)),
            scratch_shapes=[pltpu.VMEM((max(K1, K2), LC), f32),
                            pltpu.VMEM((Chp, NBUF), f32)],
        ),
        compiler_params=pltpu.CompilerParams(
            dimension_semantics=("parallel",)),
        cost_estimate=cost,
    )(xf, w1k, b1k, w2k, b2k)

    # Scatter the lane-dense flat result back onto the padded volume and slice
    # the interior -> (B, Cout, D, H, W) NCDHW.  Tiny XLA epilogue.
    keep = min(LC, nvol - i0)
    vol = jnp.pad(y_flat[:, :cout, :keep],
                  ((0, 0), (0, 0), (i0, nvol - i0 - keep)))
    vol = vol.reshape(B, cout, Dp, Hpd, Wpd)
    return vol[:, :, 1:1 + D, 1:1 + H, 1:1 + W]


# ---------------- pure-JAX reference (mirrors the PyTorch module) -----------
def _conv3d_relu_ref(x, w, b):
    y = jax.lax.conv_general_dilated(
        x, w, window_strides=(1, 1, 1),
        padding=((1, 1), (1, 1), (1, 1)),
        dimension_numbers=("NCDHW", "OIDHW", "NCDHW"))
    return jax.nn.relu(y + b.reshape(1, -1, 1, 1, 1))


def grid_encoder_ref(x, w1, b1, w2, b2):
    xc = jnp.transpose(x, (0, 2, 1, 3, 4))
    return _conv3d_relu_ref(_conv3d_relu_ref(xc, w1, b1), w2, b2)


if __name__ == "__main__":
    # Shapes consistent with the module: batch=2, time/depth=4,
    # input_channels=4, hidden_channels=8, output_channels=8, spatial 8x8.
    B, T, C_in, H, W = 2, 4, 4, 8, 8
    C_hid, C_out = 8, 8

    key = jax.random.PRNGKey(0)
    kx, kw1, kb1, kw2, kb2 = jax.random.split(key, 5)

    x = jax.random.normal(kx, (B, T, C_in, H, W), dtype=jnp.float32)
    # Conv3d weights in PyTorch layout (Cout, Cin, kD, kH, kW).
    w1 = 0.1 * jax.random.normal(kw1, (C_hid, C_in, 3, 3, 3), dtype=jnp.float32)
    b1 = 0.05 * jax.random.normal(kb1, (C_hid,), dtype=jnp.float32)
    w2 = 0.1 * jax.random.normal(kw2, (C_out, C_hid, 3, 3, 3), dtype=jnp.float32)
    b2 = 0.05 * jax.random.normal(kb2, (C_out,), dtype=jnp.float32)

    fwd = jax.jit(grid_encoder_forward)
    out = jax.block_until_ready(fwd(x, w1, b1, w2, b2))
    ref = jax.block_until_ready(grid_encoder_ref(x, w1, b1, w2, b2))

    assert out.shape == (B, C_out, T, H, W), out.shape
    # bf16 matmul operands (f32 accumulation) -> tolerance loosened vs pure-f32.
    max_err = float(jnp.max(jnp.abs(out - ref)))
    assert jnp.allclose(out, ref, rtol=5e-2, atol=5e-2), max_err

    print("KERNEL_OK")
</pallas_src>

<mosaic_0001>
module attributes {stable_mosaic.version = 11 : i64} {
  func.func @_grid_encoder_kernel(%arg0: i32, %arg1: memref<1x8x640xf32, #tpu.memory_space<vmem>>, %arg2: memref<8x216xbf16, #tpu.memory_space<vmem>>, %arg3: memref<8x384xf32, #tpu.memory_space<vmem>>, %arg4: memref<8x216xbf16, #tpu.memory_space<vmem>>, %arg5: memref<8x384xf32, #tpu.memory_space<vmem>>, %arg6: memref<1x8x384xf32, #tpu.memory_space<vmem>>, %arg7: memref<216x384xf32, #tpu.memory_space<vmem>>, %arg8: memref<8x640xf32, #tpu.memory_space<vmem>>) attributes {dimension_semantics = [#tpu.dimension_semantics<parallel>], iteration_bounds = array<i64: 2>, scalar_prefetch = 0 : i64, scratch_operands = 2 : i64, tpu.core_type = #tpu.core_type<tc>, window_params = [{transform_indices = @transform_0, window_bounds = array<i64: 1, 8, 640>}, {pipeline_mode = #tpu.pipeline_mode<synchronous>, transform_indices = @transform_1, window_bounds = array<i64: 8, 216>}, {pipeline_mode = #tpu.pipeline_mode<synchronous>, transform_indices = @transform_2, window_bounds = array<i64: 8, 384>}, {pipeline_mode = #tpu.pipeline_mode<synchronous>, transform_indices = @transform_3, window_bounds = array<i64: 8, 216>}, {pipeline_mode = #tpu.pipeline_mode<synchronous>, transform_indices = @transform_4, window_bounds = array<i64: 8, 384>}, {transform_indices = @transform_5, window_bounds = array<i64: 1, 8, 384>}]} {
    %c0 = arith.constant 0 : index
    %c0_0 = arith.constant 0 : index
    %c17 = arith.constant 17 : index
    %0 = vector.load %arg1[%c0, %c0_0, %c17] : memref<1x8x640xf32, #tpu.memory_space<vmem>>, vector<1x8x384xf32>
    %1 = vector.shape_cast %0 : vector<1x8x384xf32> to vector<8x384xf32>
    %c0_1 = arith.constant 0 : index
    %c0_2 = arith.constant 0 : index
    %2 = vector.load %arg7[%c0_1, %c0_2] : memref<216x384xf32, #tpu.memory_space<vmem>>, vector<8x384xf32>
    tpu.vector_store %arg7[%c0_1, %c0_2], %1 {strides = array<i32>} : memref<216x384xf32, #tpu.memory_space<vmem>>, vector<8x384xf32>,
    %c0_3 = arith.constant 0 : index
    %c0_4 = arith.constant 0 : index
    %c18 = arith.constant 18 : index
    %3 = vector.load %arg1[%c0_3, %c0_4, %c18] : memref<1x8x640xf32, #tpu.memory_space<vmem>>, vector<1x8x384xf32>
    %4 = vector.shape_cast %3 : vector<1x8x384xf32> to vector<8x384xf32>
    %c8 = arith.constant 8 : index
    %c0_5 = arith.constant 0 : index
    %5 = vector.load %arg7[%c8, %c0_5] : memref<216x384xf32, #tpu.memory_space<vmem>>, vector<8x384xf32>
    tpu.vector_store %arg7[%c8, %c0_5], %4 {strides = array<i32>} : memref<216x384xf32, #tpu.memory_space<vmem>>, vector<8x384xf32>,
    %c0_6 = arith.constant 0 : index
    %c0_7 = arith.constant 0 : index
    %c19 = arith.constant 19 : index
    %6 = vector.load %arg1[%c0_6, %c0_7, %c19] : memref<1x8x640xf32, #tpu.memory_space<vmem>>, vector<1x8x384xf32>
    %7 = vector.shape_cast %6 : vector<1x8x384xf32> to vector<8x384xf32>
    %c16 = arith.constant 16 : index
    %c0_8 = arith.constant 0 : index
    %8 = vector.load %arg7[%c16, %c0_8] : memref<216x384xf32, #tpu.memory_space<vmem>>, vector<8x384xf32>
    tpu.vector_store %arg7[%c16, %c0_8], %7 {strides = array<i32>} : memref<216x384xf32, #tpu.memory_space<vmem>>, vector<8x384xf32>,
    %c0_9 = arith.constant 0 : index
    %c0_10 = arith.constant 0 : index
    %c27 = arith.constant 27 : index
    %9 = vector.load %arg1[%c0_9, %c0_10, %c27] : memref<1x8x640xf32, #tpu.memory_space<vmem>>, vector<1x8x384xf32>
    %10 = vector.shape_cast %9 : vector<1x8x384xf32> to vector<8x384xf32>
    %c24 = arith.constant 24 : index
    %c0_11 = arith.constant 0 : index
    %11 = vector.load %arg7[%c24, %c0_11] : memref<216x384xf32, #tpu.memory_space<vmem>>, vector<8x384xf32>
    tpu.vector_store %arg7[%c24, %c0_11], %10 {strides = array<i32>} : memref<216x384xf32, #tpu.memory_space<vmem>>, vector<8x384xf32>,
    %c0_12 = arith.constant 0 : index
    %c0_13 = arith.constant 0 : index
    %c28 = arith.constant 28 : index
    %12 = vector.load %arg1[%c0_12, %c0_13, %c28] : memref<1x8x640xf32, #tpu.memory_space<vmem>>, vector<1x8x384xf32>
    %13 = vector.shape_cast %12 : vector<1x8x384xf32> to vector<8x384xf32>
    %c32 = arith.constant 32 : index
    %c0_14 = arith.constant 0 : index
    %14 = vector.load %arg7[%c32, %c0_14] : memref<216x384xf32, #tpu.memory_space<vmem>>, vector<8x384xf32>
    tpu.vector_store %arg7[%c32, %c0_14], %13 {strides = array<i32>} : memref<216x384xf32, #tpu.memory_space<vmem>>, vector<8x384xf32>,
    %c0_15 = arith.constant 0 : index
    %c0_16 = arith.constant 0 : index
    %c29 = arith.constant 29 : index
    %15 = vector.load %arg1[%c0_15, %c0_16, %c29] : memref<1x8x640xf32, #tpu.memory_space<vmem>>, vector<1x8x384xf32>
    %16 = vector.shape_cast %15 : vector<1x8x384xf32> to vector<8x384xf32>
    %c40 = arith.constant 40 : index
    %c0_17 = arith.constant 0 : index
    %17 = vector.load %arg7[%c40, %c0_17] : memref<216x384xf32, #tpu.memory_space<vmem>>, vector<8x384xf32>
    tpu.vector_store %arg7[%c40, %c0_17], %16 {strides = array<i32>} : memref<216x384xf32, #tpu.memory_space<vmem>>, vector<8x384xf32>,
    %c0_18 = arith.constant 0 : index
    %c0_19 = arith.constant 0 : index
    %c37 = arith.constant 37 : index
    %18 = vector.load %arg1[%c0_18, %c0_19, %c37] : memref<1x8x640xf32, #tpu.memory_space<vmem>>, vector<1x8x384xf32>
    %19 = vector.shape_cast %18 : vector<1x8x384xf32> to vector<8x384xf32>
    %c48 = arith.constant 48 : index
    %c0_20 = arith.constant 0 : index
    %20 = vector.load %arg7[%c48, %c0_20] : memref<216x384xf32, #tpu.memory_space<vmem>>, vector<8x384xf32>
    tpu.vector_store %arg7[%c48, %c0_20], %19 {strides = array<i32>} : memref<216x384xf32, #tpu.memory_space<vmem>>, vector<8x384xf32>,
    %c0_21 = arith.constant 0 : index
    %c0_22 = arith.constant 0 : index
    %c38 = arith.constant 38 : index
    %21 = vector.load %arg1[%c0_21, %c0_22, %c38] : memref<1x8x640xf32, #tpu.memory_space<vmem>>, vector<1x8x384xf32>
    %22 = vector.shape_cast %21 : vector<1x8x384xf32> to vector<8x384xf32>
    %c56 = arith.constant 56 : index
    %c0_23 = arith.constant 0 : index
    %23 = vector.load %arg7[%c56, %c0_23] : memref<216x384xf32, #tpu.memory_space<vmem>>, vector<8x384xf32>
    tpu.vector_store %arg7[%c56, %c0_23], %22 {strides = array<i32>} : memref<216x384xf32, #tpu.memory_space<vmem>>, vector<8x384xf32>,
    %c0_24 = arith.constant 0 : index
    %c0_25 = arith.constant 0 : index
    %c39 = arith.constant 39 : index
    %24 = vector.load %arg1[%c0_24, %c0_25, %c39] : memref<1x8x640xf32, #tpu.memory_space<vmem>>, vector<1x8x384xf32>
    %25 = vector.shape_cast %24 : vector<1x8x384xf32> to vector<8x384xf32>
    %c64 = arith.constant 64 : index
    %c0_26 = arith.constant 0 : index
    %26 = vector.load %arg7[%c64, %c0_26] : memref<216x384xf32, #tpu.memory_space<vmem>>, vector<8x384xf32>
    tpu.vector_store %arg7[%c64, %c0_26], %25 {strides = array<i32>} : memref<216x384xf32, #tpu.memory_space<vmem>>, vector<8x384xf32>,
    %c0_27 = arith.constant 0 : index
    %c0_28 = arith.constant 0 : index
    %c117 = arith.constant 117 : index
    %27 = vector.load %arg1[%c0_27, %c0_28, %c117] : memref<1x8x640xf32, #tpu.memory_space<vmem>>, vector<1x8x384xf32>
    %28 = vector.shape_cast %27 : vector<1x8x384xf32> to vector<8x384xf32>
    %c72 = arith.constant 72 : index
    %c0_29 = arith.constant 0 : index
    %29 = vector.load %arg7[%c72, %c0_29] : memref<216x384xf32, #tpu.memory_space<vmem>>, vector<8x384xf32>
    tpu.vector_store %arg7[%c72, %c0_29], %28 {strides = array<i32>} : memref<216x384xf32, #tpu.memory_space<vmem>>, vector<8x384xf32>,
    %c0_30 = arith.constant 0 : index
    %c0_31 = arith.constant 0 : index
    %c118 = arith.constant 118 : index
    %30 = vector.load %arg1[%c0_30, %c0_31, %c118] : memref<1x8x640xf32, #tpu.memory_space<vmem>>, vector<1x8x384xf32>
    %31 = vector.shape_cast %30 : vector<1x8x384xf32> to vector<8x384xf32>
    %c80 = arith.constant 80 : index
    %c0_32 = arith.constant 0 : index
    %32 = vector.load %arg7[%c80, %c0_32] : memref<216x384xf32, #tpu.memory_space<vmem>>, vector<8x384xf32>
    tpu.vector_store %arg7[%c80, %c0_32], %31 {strides = array<i32>} : memref<216x384xf32, #tpu.memory_space<vmem>>, vector<8x384xf32>,
    %c0_33 = arith.constant 0 : index
    %c0_34 = arith.constant 0 : index
    %c119 = arith.constant 119 : index
    %33 = vector.load %arg1[%c0_33, %c0_34, %c119] : memref<1x8x640xf32, #tpu.memory_space<vmem>>, vector<1x8x384xf32>
    %34 = vector.shape_cast %33 : vector<1x8x384xf32> to vector<8x384xf32>
    %c88 = arith.constant 88 : index
    %c0_35 = arith.constant 0 : index
    %35 = vector.load %arg7[%c88, %c0_35] : memref<216x384xf32, #tpu.memory_space<vmem>>, vector<8x384xf32>
    tpu.vector_store %arg7[%c88, %c0_35], %34 {strides = array<i32>} : memref<216x384xf32, #tpu.memory_space<vmem>>, vector<8x384xf32>,
    %c0_36 = arith.constant 0 : index
    %c0_37 = arith.constant 0 : index
    %c127 = arith.constant 127 : index
    %36 = vector.load %arg1[%c0_36, %c0_37, %c127] : memref<1x8x640xf32, #tpu.memory_space<vmem>>, vector<1x8x384xf32>
    %37 = vector.shape_cast %36 : vector<1x8x384xf32> to vector<8x384xf32>
    %c96 = arith.constant 96 : index
    %c0_38 = arith.constant 0 : index
    %38 = vector.load %arg7[%c96, %c0_38] : memref<216x384xf32, #tpu.memory_space<vmem>>, vector<8x384xf32>
    tpu.vector_store %arg7[%c96, %c0_38], %37 {strides = array<i32>} : memref<216x384xf32, #tpu.memory_space<vmem>>, vector<8x384xf32>,
    %c0_39 = arith.constant 0 : index
    %c0_40 = arith.constant 0 : index
    %c128 = arith.constant 128 : index
    %39 = vector.load %arg1[%c0_39, %c0_40, %c128] : memref<1x8x640xf32, #tpu.memory_space<vmem>>, vector<1x8x384xf32>
    %40 = vector.shape_cast %39 : vector<1x8x384xf32> to vector<8x384xf32>
    %c104 = arith.constant 104 : index
    %c0_41 = arith.constant 0 : index
    %41 = vector.load %arg7[%c104, %c0_41] : memref<216x384xf32, #tpu.memory_space<vmem>>, vector<8x384xf32>
    tpu.vector_store %arg7[%c104, %c0_41], %40 {strides = array<i32>} : memref<216x384xf32, #tpu.memory_space<vmem>>, vector<8x384xf32>,
    %c0_42 = arith.constant 0 : index
    %c0_43 = arith.constant 0 : index
    %c129 = arith.constant 129 : index
    %42 = vector.load %arg1[%c0_42, %c0_43, %c129] : memref<1x8x640xf32, #tpu.memory_space<vmem>>, vector<1x8x384xf32>
    %43 = vector.shape_cast %42 : vector<1x8x384xf32> to vector<8x384xf32>
    %c112 = arith.constant 112 : index
    %c0_44 = arith.constant 0 : index
    %44 = vector.load %arg7[%c112, %c0_44] : memref<216x384xf32, #tpu.memory_space<vmem>>, vector<8x384xf32>
    tpu.vector_store %arg7[%c112, %c0_44], %43 {strides = array<i32>} : memref<216x384xf32, #tpu.memory_space<vmem>>, vector<8x384xf32>,
    %c0_45 = arith.constant 0 : index
    %c0_46 = arith.constant 0 : index
    %c137 = arith.constant 137 : index
    %45 = vector.load %arg1[%c0_45, %c0_46, %c137] : memref<1x8x640xf32, #tpu.memory_space<vmem>>, vector<1x8x384xf32>
    %46 = vector.shape_cast %45 : vector<1x8x384xf32> to vector<8x384xf32>
    %c120 = arith.constant 120 : index
    %c0_47 = arith.constant 0 : index
    %47 = vector.load %arg7[%c120, %c0_47] : memref<216x384xf32, #tpu.memory_space<vmem>>, vector<8x384xf32>
    tpu.vector_store %arg7[%c120, %c0_47], %46 {strides = array<i32>} : memref<216x384xf32, #tpu.memory_space<vmem>>, vector<8x384xf32>,
    %c0_48 = arith.constant 0 : index
    %c0_49 = arith.constant 0 : index
    %c138 = arith.constant 138 : index
    %48 = vector.load %arg1[%c0_48, %c0_49, %c138] : memref<1x8x640xf32, #tpu.memory_space<vmem>>, vector<1x8x384xf32>
    %49 = vector.shape_cast %48 : vector<1x8x384xf32> to vector<8x384xf32>
    %c128_50 = arith.constant 128 : index
    %c0_51 = arith.constant 0 : index
    %50 = vector.load %arg7[%c128_50, %c0_51] : memref<216x384xf32, #tpu.memory_space<vmem>>, vector<8x384xf32>
    tpu.vector_store %arg7[%c128_50, %c0_51], %49 {strides = array<i32>} : memref<216x384xf32, #tpu.memory_space<vmem>>, vector<8x384xf32>,
    %c0_52 = arith.constant 0 : index
    %c0_53 = arith.constant 0 : index
    %c139 = arith.constant 139 : index
    %51 = vector.load %arg1[%c0_52, %c0_53, %c139] : memref<1x8x640xf32, #tpu.memory_space<vmem>>, vector<1x8x384xf32>
    %52 = vector.shape_cast %51 : vector<1x8x384xf32> to vector<8x384xf32>
    %c136 = arith.constant 136 : index
    %c0_54 = arith.constant 0 : index
    %53 = vector.load %arg7[%c136, %c0_54] : memref<216x384xf32, #tpu.memory_space<vmem>>, vector<8x384xf32>
    tpu.vector_store %arg7[%c136, %c0_54], %52 {strides = array<i32>} : memref<216x384xf32, #tpu.memory_space<vmem>>, vector<8x384xf32>,
    %c0_55 = arith.constant 0 : index
    %c0_56 = arith.constant 0 : index
    %c217 = arith.constant 217 : index
    %54 = vector.load %arg1[%c0_55, %c0_56, %c217] : memref<1x8x640xf32, #tpu.memory_space<vmem>>, vector<1x8x384xf32>
    %55 = vector.shape_cast %54 : vector<1x8x384xf32> to vector<8x384xf32>
    %c144 = arith.constant 144 : index
    %c0_57 = arith.constant 0 : index
    %56 = vector.load %arg7[%c144, %c0_57] : memref<216x384xf32, #tpu.memory_space<vmem>>, vector<8x384xf32>
    tpu.vector_store %arg7[%c144, %c0_57], %55 {strides = array<i32>} : memref<216x384xf32, #tpu.memory_space<vmem>>, vector<8x384xf32>,
    %c0_58 = arith.constant 0 : index
    %c0_59 = arith.constant 0 : index
    %c218 = arith.constant 218 : index
    %57 = vector.load %arg1[%c0_58, %c0_59, %c218] : memref<1x8x640xf32, #tpu.memory_space<vmem>>, vector<1x8x384xf32>
    %58 = vector.shape_cast %57 : vector<1x8x384xf32> to vector<8x384xf32>
    %c152 = arith.constant 152 : index
    %c0_60 = arith.constant 0 : index
    %59 = vector.load %arg7[%c152, %c0_60] : memref<216x384xf32, #tpu.memory_space<vmem>>, vector<8x384xf32>
    tpu.vector_store %arg7[%c152, %c0_60], %58 {strides = array<i32>} : memref<216x384xf32, #tpu.memory_space<vmem>>, vector<8x384xf32>,
    %c0_61 = arith.constant 0 : index
    %c0_62 = arith.constant 0 : index
    %c219 = arith.constant 219 : index
    %60 = vector.load %arg1[%c0_61, %c0_62, %c219] : memref<1x8x640xf32, #tpu.memory_space<vmem>>, vector<1x8x384xf32>
    %61 = vector.shape_cast %60 : vector<1x8x384xf32> to vector<8x384xf32>
    %c160 = arith.constant 160 : index
    %c0_63 = arith.constant 0 : index
    %62 = vector.load %arg7[%c160, %c0_63] : memref<216x384xf32, #tpu.memory_space<vmem>>, vector<8x384xf32>
    tpu.vector_store %arg7[%c160, %c0_63], %61 {strides = array<i32>} : memref<216x384xf32, #tpu.memory_space<vmem>>, vector<8x384xf32>,
    %c0_64 = arith.constant 0 : index
    %c0_65 = arith.constant 0 : index
    %c227 = arith.constant 227 : index
    %63 = vector.load %arg1[%c0_64, %c0_65, %c227] : memref<1x8x640xf32, #tpu.memory_space<vmem>>, vector<1x8x384xf32>
    %64 = vector.shape_cast %63 : vector<1x8x384xf32> to vector<8x384xf32>
    %c168 = arith.constant 168 : index
    %c0_66 = arith.constant 0 : index
    %65 = vector.load %arg7[%c168, %c0_66] : memref<216x384xf32, #tpu.memory_space<vmem>>, vector<8x384xf32>
    tpu.vector_store %arg7[%c168, %c0_66], %64 {strides = array<i32>} : memref<216x384xf32, #tpu.memory_space<vmem>>, vector<8x384xf32>,
    %c0_67 = arith.constant 0 : index
    %c0_68 = arith.constant 0 : index
    %c228 = arith.constant 228 : index
    %66 = vector.load %arg1[%c0_67, %c0_68, %c228] : memref<1x8x640xf32, #tpu.memory_space<vmem>>, vector<1x8x384xf32>
    %67 = vector.shape_cast %66 : vector<1x8x384xf32> to vector<8x384xf32>
    %c176 = arith.constant 176 : index
    %c0_69 = arith.constant 0 : index
    %68 = vector.load %arg7[%c176, %c0_69] : memref<216x384xf32, #tpu.memory_space<vmem>>, vector<8x384xf32>
    tpu.vector_store %arg7[%c176, %c0_69], %67 {strides = array<i32>} : memref<216x384xf32, #tpu.memory_space<vmem>>, vector<8x384xf32>,
    %c0_70 = arith.constant 0 : index
    %c0_71 = arith.constant 0 : index
    %c229 = arith.constant 229 : index
    %69 = vector.load %arg1[%c0_70, %c0_71, %c229] : memref<1x8x640xf32, #tpu.memory_space<vmem>>, vector<1x8x384xf32>
    %70 = vector.shape_cast %69 : vector<1x8x384xf32> to vector<8x384xf32>
    %c184 = arith.constant 184 : index
    %c0_72 = arith.constant 0 : index
    %71 = vector.load %arg7[%c184, %c0_72] : memref<216x384xf32, #tpu.memory_space<vmem>>, vector<8x384xf32>
    tpu.vector_store %arg7[%c184, %c0_72], %70 {strides = array<i32>} : memref<216x384xf32, #tpu.memory_space<vmem>>, vector<8x384xf32>,
    %c0_73 = arith.constant 0 : index
    %c0_74 = arith.constant 0 : index
    %c237 = arith.constant 237 : index
    %72 = vector.load %arg1[%c0_73, %c0_74, %c237] : memref<1x8x640xf32, #tpu.memory_space<vmem>>, vector<1x8x384xf32>
    %73 = vector.shape_cast %72 : vector<1x8x384xf32> to vector<8x384xf32>
    %c192 = arith.constant 192 : index
    %c0_75 = arith.constant 0 : index
    %74 = vector.load %arg7[%c192, %c0_75] : memref<216x384xf32, #tpu.memory_space<vmem>>, vector<8x384xf32>
    tpu.vector_store %arg7[%c192, %c0_75], %73 {strides = array<i32>} : memref<216x384xf32, #tpu.memory_space<vmem>>, vector<8x384xf32>,
    %c0_76 = arith.constant 0 : index
    %c0_77 = arith.constant 0 : index
    %c238 = arith.constant 238 : index
    %75 = vector.load %arg1[%c0_76, %c0_77, %c238] : memref<1x8x640xf32, #tpu.memory_space<vmem>>, vector<1x8x384xf32>
    %76 = vector.shape_cast %75 : vector<1x8x384xf32> to vector<8x384xf32>
    %c200 = arith.constant 200 : index
    %c0_78 = arith.constant 0 : index
    %77 = vector.load %arg7[%c200, %c0_78] : memref<216x384xf32, #tpu.memory_space<vmem>>, vector<8x384xf32>
    tpu.vector_store %arg7[%c200, %c0_78], %76 {strides = array<i32>} : memref<216x384xf32, #tpu.memory_space<vmem>>, vector<8x384xf32>,
    %c0_79 = arith.constant 0 : index
    %c0_80 = arith.constant 0 : index
    %c239 = arith.constant 239 : index
    %78 = vector.load %arg1[%c0_79, %c0_80, %c239] : memref<1x8x640xf32, #tpu.memory_space<vmem>>, vector<1x8x384xf32>
    %79 = vector.shape_cast %78 : vector<1x8x384xf32> to vector<8x384xf32>
    %c208 = arith.constant 208 : index
    %c0_81 = arith.constant 0 : index
    %80 = vector.load %arg7[%c208, %c0_81] : memref<216x384xf32, #tpu.memory_space<vmem>>, vector<8x384xf32>
    tpu.vector_store %arg7[%c208, %c0_81], %79 {strides = array<i32>} : memref<216x384xf32, #tpu.memory_space<vmem>>, vector<8x384xf32>,
    %c0_82 = arith.constant 0 : index
    %c0_83 = arith.constant 0 : index
    %81 = vector.load %arg2[%c0_82, %c0_83] : memref<8x216xbf16, #tpu.memory_space<vmem>>, vector<8x216xbf16>
    %c0_84 = arith.constant 0 : index
    %c0_85 = arith.constant 0 : index
    %82 = vector.load %arg7[%c0_84, %c0_85] : memref<216x384xf32, #tpu.memory_space<vmem>>, vector<216x384xf32>
    %83 = arith.truncf %82 : vector<216x384xf32> to vector<216x384xbf16>
    %cst = arith.constant dense<0.000000e+00> : vector<8x384xf32>
    %84 = tpu.matmul %81, %83, %cst {dimension_numbers = #tpu.dot_dimension_numbers<[1], [0], [0], [1], [0, 0, 1, 1], [], []>} : vector<8x216xbf16>, vector<216x384xbf16>, vector<8x384xf32> -> vector<8x384xf32>
    %c0_86 = arith.constant 0 : index
    %c0_87 = arith.constant 0 : index
    %85 = vector.load %arg3[%c0_86, %c0_87] : memref<8x384xf32, #tpu.memory_space<vmem>>, vector<8x384xf32>
    %86 = arith.addf %84, %85 : vector<8x384xf32>
    %cst_88 = arith.constant 0.000000e+00 : f32
    %87 = vector.broadcast %cst_88 : f32 to vector<8x384xf32>
    %88 = arith.maximumf %86, %87 : vector<8x384xf32>
    %89 = tpu.iota {dimensions = array<i32: 1>} : vector<1x384xi32>
    %90 = arith.sitofp %89 : vector<1x384xi32> to vector<1x384xf32>
    %cst_89 = arith.constant 1.110000e+02 : f32
    %91 = vector.broadcast %cst_89 : f32 to vector<1x384xf32>
    %92 = arith.addf %90, %91 : vector<1x384xf32>
    %cst_90 = arith.constant 5.000000e-01 : f32
    %93 = vector.broadcast %cst_90 : f32 to vector<1x384xf32>
    %94 = arith.addf %92, %93 : vector<1x384xf32>
    %cst_91 = arith.constant 0.00999999977 : f32
    %95 = vector.broadcast %cst_91 : f32 to vector<1x384xf32>
    %96 = arith.mulf %94, %95 : vector<1x384xf32>
    %97 = math.floor %96 : vector<1x384xf32>
    %cst_92 = arith.constant 1.000000e+02 : f32
    %98 = vector.broadcast %cst_92 : f32 to vector<1x384xf32>
    %99 = arith.mulf %97, %98 : vector<1x384xf32>
    %100 = arith.subf %92, %99 : vector<1x384xf32>
    %cst_93 = arith.constant 5.000000e-01 : f32
    %101 = vector.broadcast %cst_93 : f32 to vector<1x384xf32>
    %102 = arith.addf %100, %101 : vector<1x384xf32>
    %cst_94 = arith.constant 1.000000e-01 : f32
    %103 = vector.broadcast %cst_94 : f32 to vector<1x384xf32>
    %104 = arith.mulf %102, %103 : vector<1x384xf32>
    %105 = math.floor %104 : vector<1x384xf32>
    %cst_95 = arith.constant 1.000000e+01 : f32
    %106 = vector.broadcast %cst_95 : f32 to vector<1x384xf32>
    %107 = arith.mulf %105, %106 : vector<1x384xf32>
    %108 = arith.subf %100, %107 : vector<1x384xf32>
    %cst_96 = arith.constant 1.000000e+00 : f32
    %109 = vector.broadcast %cst_96 : f32 to vector<1x384xf32>
    %110 = arith.cmpf oge, %97, %109 : vector<1x384xf32>
    %cst_97 = arith.constant 4.000000e+00 : f32
    %111 = vector.broadcast %cst_97 : f32 to vector<1x384xf32>
    %112 = arith.cmpf ole, %97, %111 : vector<1x384xf32>
    %113 = arith.andi %110, %112 : vector<1x384xi1>
    %cst_98 = arith.constant 1.000000e+00 : f32
    %114 = vector.broadcast %cst_98 : f32 to vector<1x384xf32>
    %115 = arith.cmpf oge, %105, %114 : vector<1x384xf32>
    %116 = arith.andi %113, %115 : vector<1x384xi1>
    %cst_99 = arith.constant 8.000000e+00 : f32
    %117 = vector.broadcast %cst_99 : f32 to vector<1x384xf32>
    %118 = arith.cmpf ole, %105, %117 : vector<1x384xf32>
    %119 = arith.andi %116, %118 : vector<1x384xi1>
    %cst_100 = arith.constant 1.000000e+00 : f32
    %120 = vector.broadcast %cst_100 : f32 to vector<1x384xf32>
    %121 = arith.cmpf oge, %108, %120 : vector<1x384xf32>
    %122 = arith.andi %119, %121 : vector<1x384xi1>
    %cst_101 = arith.constant 8.000000e+00 : f32
    %123 = vector.broadcast %cst_101 : f32 to vector<1x384xf32>
    %124 = arith.cmpf ole, %108, %123 : vector<1x384xf32>
    %125 = arith.andi %122, %124 : vector<1x384xi1>
    %cst_102 = arith.constant 0.000000e+00 : f32
    %126 = vector.shape_cast %125 : vector<1x384xi1> to vector<1x384xi1>
    %127 = vector.broadcast %126 : vector<1x384xi1> to vector<8x384xi1>
    %128 = vector.broadcast %cst_102 : f32 to vector<8x384xf32>
    %129 = arith.select %127, %88, %128 : vector<8x384xi1>, vector<8x384xf32>
    %cst_103 = arith.constant 0.000000e+00 : f32
    %130 = vector.broadcast %cst_103 : f32 to vector<8x128xf32>
    %c0_104 = arith.constant 0 : index
    %c0_105 = arith.constant 0 : index
    %131 = vector.load %arg8[%c0_104, %c0_105] : memref<8x640xf32, #tpu.memory_space<vmem>>, vector<8x128xf32>
    tpu.vector_store %arg8[%c0_104, %c0_105], %130 {strides = array<i32>} : memref<8x640xf32, #tpu.memory_space<vmem>>, vector<8x128xf32>,
    %cst_106 = arith.constant 0.000000e+00 : f32
    %132 = vector.broadcast %cst_106 : f32 to vector<8x128xf32>
    %c0_107 = arith.constant 0 : index
    %c512 = arith.constant 512 : index
    %133 = vector.load %arg8[%c0_107, %c512] : memref<8x640xf32, #tpu.memory_space<vmem>>, vector<8x128xf32>
    tpu.vector_store %arg8[%c0_107, %c512], %132 {strides = array<i32>} : memref<8x640xf32, #tpu.memory_space<vmem>>, vector<8x128xf32>,
    %c0_108 = arith.constant 0 : index
    %c128_109 = arith.constant 128 : index
    %134 = vector.load %arg8[%c0_108, %c128_109] : memref<8x640xf32, #tpu.memory_space<vmem>>, vector<8x384xf32>
    tpu.vector_store %arg8[%c0_108, %c128_109], %129 {strides = array<i32>} : memref<8x640xf32, #tpu.memory_space<vmem>>, vector<8x384xf32>,
    %c0_110 = arith.constant 0 : index
    %c17_111 = arith.constant 17 : index
    %135 = vector.load %arg8[%c0_110, %c17_111] : memref<8x640xf32, #tpu.memory_space<vmem>>, vector<8x384xf32>
    %c0_112 = arith.constant 0 : index
    %c0_113 = arith.constant 0 : index
    %136 = vector.load %arg7[%c0_112, %c0_113] : memref<216x384xf32, #tpu.memory_space<vmem>>, vector<8x384xf32>
    tpu.vector_store %arg7[%c0_112, %c0_113], %135 {strides = array<i32>} : memref<216x384xf32, #tpu.memory_space<vmem>>, vector<8x384xf32>,
    %c0_114 = arith.constant 0 : index
    %c18_115 = arith.constant 18 : index
    %137 = vector.load %arg8[%c0_114, %c18_115] : memref<8x640xf32, #tpu.memory_space<vmem>>, vector<8x384xf32>
    %c8_116 = arith.constant 8 : index
    %c0_117 = arith.constant 0 : index
    %138 = vector.load %arg7[%c8_116, %c0_117] : memref<216x384xf32, #tpu.memory_space<vmem>>, vector<8x384xf32>
    tpu.vector_store %arg7[%c8_116, %c0_117], %137 {strides = array<i32>} : memref<216x384xf32, #tpu.memory_space<vmem>>, vector<8x384xf32>,
    %c0_118 = arith.constant 0 : index
    %c19_119 = arith.constant 19 : index
    %139 = vector.load %arg8[%c0_118, %c19_119] : memref<8x640xf32, #tpu.memory_space<vmem>>, vector<8x384xf32>
    %c16_120 = arith.constant 16 : index
    %c0_121 = arith.constant 0 : index
    %140 = vector.load %arg7[%c16_120, %c0_121] : memref<216x384xf32, #tpu.memory_space<vmem>>, vector<8x384xf32>
    tpu.vector_store %arg7[%c16_120, %c0_121], %139 {strides = array<i32>} : memref<216x384xf32, #tpu.memory_space<vmem>>, vector<8x384xf32>,
    %c0_122 = arith.constant 0 : index
    %c27_123 = arith.constant 27 : index
    %141 = vector.load %arg8[%c0_122, %c27_123] : memref<8x640xf32, #tpu.memory_space<vmem>>, vector<8x384xf32>
    %c24_124 = arith.constant 24 : index
    %c0_125 = arith.constant 0 : index
    %142 = vector.load %arg7[%c24_124, %c0_125] : memref<216x384xf32, #tpu.memory_space<vmem>>, vector<8x384xf32>
    tpu.vector_store %arg7[%c24_124, %c0_125], %141 {strides = array<i32>} : memref<216x384xf32, #tpu.memory_space<vmem>>, vector<8x384xf32>,
    %c0_126 = arith.constant 0 : index
    %c28_127 = arith.constant 28 : index
    %143 = vector.load %arg8[%c0_126, %c28_127] : memref<8x640xf32, #tpu.memory_space<vmem>>, vector<8x384xf32>
    %c32_128 = arith.constant 32 : index
    %c0_129 = arith.constant 0 : index
    %144 = vector.load %arg7[%c32_128, %c0_129] : memref<216x384xf32, #tpu.memory_space<vmem>>, vector<8x384xf32>
    tpu.vector_store %arg7[%c32_128, %c0_129], %143 {strides = array<i32>} : memref<216x384xf32, #tpu.memory_space<vmem>>, vector<8x384xf32>,
    %c0_130 = arith.constant 0 : index
    %c29_131 = arith.constant 29 : index
    %145 = vector.load %arg8[%c0_130, %c29_131] : memref<8x640xf32, #tpu.memory_space<vmem>>, vector<8x384xf32>
    %c40_132 = arith.constant 40 : index
    %c0_133 = arith.constant 0 : index
    %146 = vector.load %arg7[%c40_132, %c0_133] : memref<216x384xf32, #tpu.memory_space<vmem>>, vector<8x384xf32>
    tpu.vector_store %arg7[%c40_132, %c0_133], %145 {strides = array<i32>} : memref<216x384xf32, #tpu.memory_space<vmem>>, vector<8x384xf32>,
    %c0_134 = arith.constant 0 : index
    %c37_135 = arith.constant 37 : index
    %147 = vector.load %arg8[%c0_134, %c37_135] : memref<8x640xf32, #tpu.memory_space<vmem>>, vector<8x384xf32>
    %c48_136 = arith.constant 48 : index
    %c0_137 = arith.constant 0 : index
    %148 = vector.load %arg7[%c48_136, %c0_137] : memref<216x384xf32, #tpu.memory_space<vmem>>, vector<8x384xf32>
    tpu.vector_store %arg7[%c48_136, %c0_137], %147 {strides = array<i32>} : memref<216x384xf32, #tpu.memory_space<vmem>>, vector<8x384xf32>,
    %c0_138 = arith.constant 0 : index
    %c38_139 = arith.constant 38 : index
    %149 = vector.load %arg8[%c0_138, %c38_139] : memref<8x640xf32, #tpu.memory_space<vmem>>, vector<8x384xf32>
    %c56_140 = arith.constant 56 : index
    %c0_141 = arith.constant 0 : index
    %150 = vector.load %arg7[%c56_140, %c0_141] : memref<216x384xf32, #tpu.memory_space<vmem>>, vector<8x384xf32>
    tpu.vector_store %arg7[%c56_140, %c0_141], %149 {strides = array<i32>} : memref<216x384xf32, #tpu.memory_space<vmem>>, vector<8x384xf32>,
    %c0_142 = arith.constant 0 : index
    %c39_143 = arith.constant 39 : index
    %151 = vector.load %arg8[%c0_142, %c39_143] : memref<8x640xf32, #tpu.memory_space<vmem>>, vector<8x384xf32>
    %c64_144 = arith.constant 64 : index
    %c0_145 = arith.constant 0 : index
    %152 = vector.load %arg7[%c64_144, %c0_145] : memref<216x384xf32, #tpu.memory_space<vmem>>, vector<8x384xf32>
    tpu.vector_store %arg7[%c64_144, %c0_145], %151 {strides = array<i32>} : memref<216x384xf32, #tpu.memory_space<vmem>>, vector<8x384xf32>,
    %c0_146 = arith.constant 0 : index
    %c117_147 = arith.constant 117 : index
    %153 = vector.load %arg8[%c0_146, %c117_147] : memref<8x640xf32, #tpu.memory_space<vmem>>, vector<8x384xf32>
    %c72_148 = arith.constant 72 : index
    %c0_149 = arith.constant 0 : index
    %154 = vector.load %arg7[%c72_148, %c0_149] : memref<216x384xf32, #tpu.memory_space<vmem>>, vector<8x384xf32>
    tpu.vector_store %arg7[%c72_148, %c0_149], %153 {strides = array<i32>} : memref<216x384xf32, #tpu.memory_space<vmem>>, vector<8x384xf32>,
    %c0_150 = arith.constant 0 : index
    %c118_151 = arith.constant 118 : index
    %155 = vector.load %arg8[%c0_150, %c118_151] : memref<8x640xf32, #tpu.memory_space<vmem>>, vector<8x384xf32>
    %c80_152 = arith.constant 80 : index
    %c0_153 = arith.constant 0 : index
    %156 = vector.load %arg7[%c80_152, %c0_153] : memref<216x384xf32, #tpu.memory_space<vmem>>, vector<8x384xf32>
    tpu.vector_store %arg7[%c80_152, %c0_153], %155 {strides = array<i32>} : memref<216x384xf32, #tpu.memory_space<vmem>>, vector<8x384xf32>,
    %c0_154 = arith.constant 0 : index
    %c119_155 = arith.constant 119 : index
    %157 = vector.load %arg8[%c0_154, %c119_155] : memref<8x640xf32, #tpu.memory_space<vmem>>, vector<8x384xf32>
    %c88_156 = arith.constant 88 : index
    %c0_157 = arith.constant 0 : index
    %158 = vector.load %arg7[%c88_156, %c0_157] : memref<216x384xf32, #tpu.memory_space<vmem>>, vector<8x384xf32>
    tpu.vector_store %arg7[%c88_156, %c0_157], %157 {strides = array<i32>} : memref<216x384xf32, #tpu.memory_space<vmem>>, vector<8x384xf32>,
    %c0_158 = arith.constant 0 : index
    %c127_159 = arith.constant 127 : index
    %159 = vector.load %arg8[%c0_158, %c127_159] : memref<8x640xf32, #tpu.memory_space<vmem>>, vector<8x384xf32>
    %c96_160 = arith.constant 96 : index
    %c0_161 = arith.constant 0 : index
    %160 = vector.load %arg7[%c96_160, %c0_161] : memref<216x384xf32, #tpu.memory_space<vmem>>, vector<8x384xf32>
    tpu.vector_store %arg7[%c96_160, %c0_161], %159 {strides = array<i32>} : memref<216x384xf32, #tpu.memory_space<vmem>>, vector<8x384xf32>,
    %c0_162 = arith.constant 0 : index
    %c128_163 = arith.constant 128 : index
    %161 = vector.load %arg8[%c0_162, %c128_163] : memref<8x640xf32, #tpu.memory_space<vmem>>, vector<8x384xf32>
    %c104_164 = arith.constant 104 : index
    %c0_165 = arith.constant 0 : index
    %162 = vector.load %arg7[%c104_164, %c0_165] : memref<216x384xf32, #tpu.memory_space<vmem>>, vector<8x384xf32>
    tpu.vector_store %arg7[%c104_164, %c0_165], %161 {strides = array<i32>} : memref<216x384xf32, #tpu.memory_space<vmem>>, vector<8x384xf32>,
    %c0_166 = arith.constant 0 : index
    %c129_167 = arith.constant 129 : index
    %163 = vector.load %arg8[%c0_166, %c129_167] : memref<8x640xf32, #tpu.memory_space<vmem>>, vector<8x384xf32>
    %c112_168 = arith.constant 112 : index
    %c0_169 = arith.constant 0 : index
    %164 = vector.load %arg7[%c112_168, %c0_169] : memref<216x384xf32, #tpu.memory_space<vmem>>, vector<8x384xf32>
    tpu.vector_store %arg7[%c112_168, %c0_169], %163 {strides = array<i32>} : memref<216x384xf32, #tpu.memory_space<vmem>>, vector<8x384xf32>,
    %c0_170 = arith.constant 0 : index
    %c137_171 = arith.constant 137 : index
    %165 = vector.load %arg8[%c0_170, %c137_171] : memref<8x640xf32, #tpu.memory_space<vmem>>, vector<8x384xf32>
    %c120_172 = arith.constant 120 : index
    %c0_173 = arith.constant 0 : index
    %166 = vector.load %arg7[%c120_172, %c0_173] : memref<216x384xf32, #tpu.memory_space<vmem>>, vector<8x384xf32>
    tpu.vector_store %arg7[%c120_172, %c0_173], %165 {strides = array<i32>} : memref<216x384xf32, #tpu.memory_space<vmem>>, vector<8x384xf32>,
    %c0_174 = arith.constant 0 : index
    %c138_175 = arith.constant 138 : index
    %167 = vector.load %arg8[%c0_174, %c138_175] : memref<8x640xf32, #tpu.memory_space<vmem>>, vector<8x384xf32>
    %c128_176 = arith.constant 128 : index
    %c0_177 = arith.constant 0 : index
    %168 = vector.load %arg7[%c128_176, %c0_177] : memref<216x384xf32, #tpu.memory_space<vmem>>, vector<8x384xf32>
    tpu.vector_store %arg7[%c128_176, %c0_177], %167 {strides = array<i32>} : memref<216x384xf32, #tpu.memory_space<vmem>>, vector<8x384xf32>,
    %c0_178 = arith.constant 0 : index
    %c139_179 = arith.constant 139 : index
    %169 = vector.load %arg8[%c0_178, %c139_179] : memref<8x640xf32, #tpu.memory_space<vmem>>, vector<8x384xf32>
    %c136_180 = arith.constant 136 : index
    %c0_181 = arith.constant 0 : index
    %170 = vector.load %arg7[%c136_180, %c0_181] : memref<216x384xf32, #tpu.memory_space<vmem>>, vector<8x384xf32>
    tpu.vector_store %arg7[%c136_180, %c0_181], %169 {strides = array<i32>} : memref<216x384xf32, #tpu.memory_space<vmem>>, vector<8x384xf32>,
    %c0_182 = arith.constant 0 : index
    %c217_183 = arith.constant 217 : index
    %171 = vector.load %arg8[%c0_182, %c217_183] : memref<8x640xf32, #tpu.memory_space<vmem>>, vector<8x384xf32>
    %c144_184 = arith.constant 144 : index
    %c0_185 = arith.constant 0 : index
    %172 = vector.load %arg7[%c144_184, %c0_185] : memref<216x384xf32, #tpu.memory_space<vmem>>, vector<8x384xf32>
    tpu.vector_store %arg7[%c144_184, %c0_185], %171 {strides = array<i32>} : memref<216x384xf32, #tpu.memory_space<vmem>>, vector<8x384xf32>,
    %c0_186 = arith.constant 0 : index
    %c218_187 = arith.constant 218 : index
    %173 = vector.load %arg8[%c0_186, %c218_187] : memref<8x640xf32, #tpu.memory_space<vmem>>, vector<8x384xf32>
    %c152_188 = arith.constant 152 : index
    %c0_189 = arith.constant 0 : index
    %174 = vector.load %arg7[%c152_188, %c0_189] : memref<216x384xf32, #tpu.memory_space<vmem>>, vector<8x384xf32>
    tpu.vector_store %arg7[%c152_188, %c0_189], %173 {strides = array<i32>} : memref<216x384xf32, #tpu.memory_space<vmem>>, vector<8x384xf32>,
    %c0_190 = arith.constant 0 : index
    %c219_191 = arith.constant 219 : index
    %175 = vector.load %arg8[%c0_190, %c219_191] : memref<8x640xf32, #tpu.memory_space<vmem>>, vector<8x384xf32>
    %c160_192 = arith.constant 160 : index
    %c0_193 = arith.constant 0 : index
    %176 = vector.load %arg7[%c160_192, %c0_193] : memref<216x384xf32, #tpu.memory_space<vmem>>, vector<8x384xf32>
    tpu.vector_store %arg7[%c160_192, %c0_193], %175 {strides = array<i32>} : memref<216x384xf32, #tpu.memory_space<vmem>>, vector<8x384xf32>,
    %c0_194 = arith.constant 0 : index
    %c227_195 = arith.constant 227 : index
    %177 = vector.load %arg8[%c0_194, %c227_195] : memref<8x640xf32, #tpu.memory_space<vmem>>, vector<8x384xf32>
    %c168_196 = arith.constant 168 : index
    %c0_197 = arith.constant 0 : index
    %178 = vector.load %arg7[%c168_196, %c0_197] : memref<216x384xf32, #tpu.memory_space<vmem>>, vector<8x384xf32>
    tpu.vector_store %arg7[%c168_196, %c0_197], %177 {strides = array<i32>} : memref<216x384xf32, #tpu.memory_space<vmem>>, vector<8x384xf32>,
    %c0_198 = arith.constant 0 : index
    %c228_199 = arith.constant 228 : index
    %179 = vector.load %arg8[%c0_198, %c228_199] : memref<8x640xf32, #tpu.memory_space<vmem>>, vector<8x384xf32>
    %c176_200 = arith.constant 176 : index
    %c0_201 = arith.constant 0 : index
    %180 = vector.load %arg7[%c176_200, %c0_201] : memref<216x384xf32, #tpu.memory_space<vmem>>, vector<8x384xf32>
    tpu.vector_store %arg7[%c176_200, %c0_201], %179 {strides = array<i32>} : memref<216x384xf32, #tpu.memory_space<vmem>>, vector<8x384xf32>,
    %c0_202 = arith.constant 0 : index
    %c229_203 = arith.constant 229 : index
    %181 = vector.load %arg8[%c0_202, %c229_203] : memref<8x640xf32, #tpu.memory_space<vmem>>, vector<8x384xf32>
    %c184_204 = arith.constant 184 : index
    %c0_205 = arith.constant 0 : index
    %182 = vector.load %arg7[%c184_204, %c0_205] : memref<216x384xf32, #tpu.memory_space<vmem>>, vector<8x384xf32>
    tpu.vector_store %arg7[%c184_204, %c0_205], %181 {strides = array<i32>} : memref<216x384xf32, #tpu.memory_space<vmem>>, vector<8x384xf32>,
    %c0_206 = arith.constant 0 : index
    %c237_207 = arith.constant 237 : index
    %183 = vector.load %arg8[%c0_206, %c237_207] : memref<8x640xf32, #tpu.memory_space<vmem>>, vector<8x384xf32>
    %c192_208 = arith.constant 192 : index
    %c0_209 = arith.constant 0 : index
    %184 = vector.load %arg7[%c192_208, %c0_209] : memref<216x384xf32, #tpu.memory_space<vmem>>, vector<8x384xf32>
    tpu.vector_store %arg7[%c192_208, %c0_209], %183 {strides = array<i32>} : memref<216x384xf32, #tpu.memory_space<vmem>>, vector<8x384xf32>,
    %c0_210 = arith.constant 0 : index
    %c238_211 = arith.constant 238 : index
    %185 = vector.load %arg8[%c0_210, %c238_211] : memref<8x640xf32, #tpu.memory_space<vmem>>, vector<8x384xf32>
    %c200_212 = arith.constant 200 : index
    %c0_213 = arith.constant 0 : index
    %186 = vector.load %arg7[%c200_212, %c0_213] : memref<216x384xf32, #tpu.memory_space<vmem>>, vector<8x384xf32>
    tpu.vector_store %arg7[%c200_212, %c0_213], %185 {strides = array<i32>} : memref<216x384xf32, #tpu.memory_space<vmem>>, vector<8x384xf32>,
    %c0_214 = arith.constant 0 : index
    %c239_215 = arith.constant 239 : index
    %187 = vector.load %arg8[%c0_214, %c239_215] : memref<8x640xf32, #tpu.memory_space<vmem>>, vector<8x384xf32>
    %c208_216 = arith.constant 208 : index
    %c0_217 = arith.constant 0 : index
    %188 = vector.load %arg7[%c208_216, %c0_217] : memref<216x384xf32, #tpu.memory_space<vmem>>, vector<8x384xf32>
    tpu.vector_store %arg7[%c208_216, %c0_217], %187 {strides = array<i32>} : memref<216x384xf32, #tpu.memory_space<vmem>>, vector<8x384xf32>,
    %c0_218 = arith.constant 0 : index
    %c0_219 = arith.constant 0 : index
    %189 = vector.load %arg4[%c0_218, %c0_219] : memref<8x216xbf16, #tpu.memory_space<vmem>>, vector<8x216xbf16>
    %c0_220 = arith.constant 0 : index
    %c0_221 = arith.constant 0 : index
    %190 = vector.load %arg7[%c0_220, %c0_221] : memref<216x384xf32, #tpu.memory_space<vmem>>, vector<216x384xf32>
    %191 = arith.truncf %190 : vector<216x384xf32> to vector<216x384xbf16>
    %cst_222 = arith.constant dense<0.000000e+00> : vector<8x384xf32>
    %192 = tpu.matmul %189, %191, %cst_222 {dimension_numbers = #tpu.dot_dimension_numbers<[1], [0], [0], [1], [0, 0, 1, 1], [], []>} : vector<8x216xbf16>, vector<216x384xbf16>, vector<8x384xf32> -> vector<8x384xf32>
    %c0_223 = arith.constant 0 : index
    %c0_224 = arith.constant 0 : index
    %193 = vector.load %arg5[%c0_223, %c0_224] : memref<8x384xf32, #tpu.memory_space<vmem>>, vector<8x384xf32>
    %194 = arith.addf %192, %193 : vector<8x384xf32>
    %cst_225 = arith.constant 0.000000e+00 : f32
    %195 = vector.broadcast %cst_225 : f32 to vector<8x384xf32>
    %196 = arith.maximumf %194, %195 : vector<8x384xf32>
    %c0_226 = arith.constant 0 : index
    %c0_227 = arith.constant 0 : index
    %c0_228 = arith.constant 0 : index
    %197 = vector.load %arg6[%c0_226, %c0_227, %c0_228] : memref<1x8x384xf32, #tpu.memory_space<vmem>>, vector<1x8x384xf32>
    %198 = vector.shape_cast %197 : vector<1x8x384xf32> to vector<8x384xf32>
    %199 = vector.shape_cast %196 : vector<8x384xf32> to vector<1x8x384xf32>
    tpu.vector_store %arg6[%c0_226, %c0_227, %c0_228], %199 {strides = array<i32>} : memref<1x8x384xf32, #tpu.memory_space<vmem>>, vector<1x8x384xf32>,
    return
  }
  func.func @transform_0(%arg0: i32) -> (i32, i32, i32) {
    %c0_i32 = arith.constant 0 : i32
    %c0_i32_0 = arith.constant 0 : i32
    %c0_i32_1 = arith.constant 0 : i32
    return %arg0, %c0_i32, %c0_i32_0 : i32, i32, i32
  }
  func.func @transform_1(%arg0: i32) -> (i32, i32) {
    %c0_i32 = arith.constant 0 : i32
    %c0_i32_0 = arith.constant 0 : i32
    %c0_i32_1 = arith.constant 0 : i32
    return %c0_i32, %c0_i32_0 : i32, i32
  }
  func.func @transform_2(%arg0: i32) -> (i32, i32) {
    %c0_i32 = arith.constant 0 : i32
    %c0_i32_0 = arith.constant 0 : i32
    %c0_i32_1 = arith.constant 0 : i32
    return %c0_i32, %c0_i32_0 : i32, i32
  }
  func.func @transform_3(%arg0: i32) -> (i32, i32) {
    %c0_i32 = arith.constant 0 : i32
    %c0_i32_0 = arith.constant 0 : i32
    %c0_i32_1 = arith.constant 0 : i32
    return %c0_i32, %c0_i32_0 : i32, i32
  }
  func.func @transform_4(%arg0: i32) -> (i32, i32) {
    %c0_i32 = arith.constant 0 : i32
    %c0_i32_0 = arith.constant 0 : i32
    %c0_i32_1 = arith.constant 0 : i32
    return %c0_i32, %c0_i32_0 : i32, i32
  }
  func.func @transform_5(%arg0: i32) -> (i32, i32, i32) {
    %c0_i32 = arith.constant 0 : i32
    %c0_i32_0 = arith.constant 0 : i32
    %c0_i32_1 = arith.constant 0 : i32
    return %arg0, %c0_i32, %c0_i32_0 : i32, i32, i32
  }
}

</mosaic_0001>

<llo_original>
// kernel: grid_encoder_forward.1
$region0: #{grid_encoder_forward.1}
  #allocation0 [shape = 'u32[]', space=smem, size = 0x4, offset = 0x4, fixed_abs, tag = 'smem constant byte address 0x4 - core index']
  #allocation1 [shape = 'u32[144,128]{1,0:T(1,128)}', space=vmem, size = 0x12000, scoped, tag = 'internal scratch']
  #allocation2 [shape = 'f32[216,384]{1,0:T(8,128)}', space=vmem, size = 0x51000, scoped, tag = 'scratch operand']
  #allocation3 [shape = 'f32[8,640]{1,0:T(8,128)}', space=vmem, size = 0x5000, scoped, tag = 'scratch operand']
  %s0 = inlined_call_operand.vmem [shape: f32[2,8,640], index: 0, kind: input, shape index: {}]
  %s1 = inlined_call_operand.vmem [shape: bf16[8,216], index: 1, kind: input, shape index: {}]
  %s2 = inlined_call_operand.vmem [shape: f32[8,384], index: 2, kind: input, shape index: {}]
  %s3 = inlined_call_operand.vmem [shape: bf16[8,216], index: 3, kind: input, shape index: {}]
  %s4 = inlined_call_operand.vmem [shape: f32[8,384], index: 4, kind: input, shape index: {}]
  %s5 = inlined_call_operand.vmem [shape: f32[2,8,384], index: 5, kind: output, shape index: {}]
  %s6 = sld [smem:[#allocation0]]
  $region53: #{grid_encoder_forward.1} parent=0
    _
  %s8 = ssub.s32 1, %s6
  %s9 = scalar_select 0, %s8, %s6
  loop: start=0, step=1, limit=4
  $region2: #{grid_encoder_forward.1} parent=0 // loop_pre_header
    _
  $region3: #{grid_encoder_forward.1} parent=0 // loop_header
    %s11 = sphi 0, %s15
    %p12 = scmp.ge.s32.totalorder %s11, 4
    %s21 = sphi 0, %s23
    %s24 = sphi 0, %s21
    %s25 = sphi 0, %s24
    %s41 = sphi 0, %s25
    %s45 = sphi 0, %s45
    %s47 = sphi 0, %s45
    %s48 = sphi 0, %s47
    %s62 = sphi 0, %s48
    %s66 = sphi 0, %s66
    %s68 = sphi 0, %s66
    %s69 = sphi 0, %s68
    %s83 = sphi 0, %s69
    %s87 = sphi 0, %s87
    %s89 = sphi 0, %s87
    %s90 = sphi 0, %s89
    %s104 = sphi 0, %s90
    %s108 = sphi 0, %s108
    %s110 = sphi 0, %s108
    %s111 = sphi 0, %s110
    %s125 = sphi 0, %s111
    %s131 = sphi 0, %s133
    %s134 = sphi 0, %s131
    %s135 = sphi 0, %s134
    %s151 = sphi 0, %s135
  $region4: #{grid_encoder_forward.1} parent=0 // loop_header_branch
    %14 = sbr.rel (%p12) target = $region8
  $region5: #{grid_encoder_forward.1} parent=0 // loop_body
    %s16 = ssub.s32 %s11, 1
    %s17 = ssub.s32 %s11, 2
    %s18 = sadd.s32 %s11, 1
    %s19 = ssub.s32 %s11, %s18
    %p20 = scmp.eq.s32.totalorder %s19, 0
    %s22 = sadd.s32 %s21, 1
    %s23 = scalar_select %p20, %s21, %s22
    %p26 = pneg %p20
    %p27 = scmp.eq.s32.totalorder %s11, 1
    %p28 = por %p26, %p27
    %p29 = scmp.ne.s32.totalorder %s21, %s24
    %p30 = scmp.eq.s32.totalorder %s11, 0
    %p31 = por %p29, %p30
    %p32 = scmp.ne.s32.totalorder %s21, %s24
    %p33 = scmp.eq.s32.totalorder %s16, 1
    %p34 = por %p32, %p33
    %p35 = scmp.ne.s32.totalorder %s24, %s25
    %p36 = scmp.eq.s32.totalorder %s16, 0
    %p37 = por %p35, %p36
    %p38 = scmp.ne.s32.totalorder %s24, %s25
    %p39 = scmp.eq.s32.totalorder %s17, 1
    %p40 = por %p38, %p39
    %p42 = scmp.ne.s32.totalorder %s25, %s41
    %p43 = scmp.eq.s32.totalorder %s17, 0
    %p44 = por %p42, %p43
    %s46 = sadd.s32 %s45, 1
    %p49 = scmp.eq.s32.totalorder %s11, 1
    %p50 = scmp.ne.s32.totalorder %s45, %s47
    %p51 = scmp.eq.s32.totalorder %s11, 0
    %p52 = por %p50, %p51
    %p53 = scmp.ne.s32.totalorder %s45, %s47
    %p54 = scmp.eq.s32.totalorder %s16, 1
    %p55 = por %p53, %p54
    %p56 = scmp.ne.s32.totalorder %s47, %s48
    %p57 = scmp.eq.s32.totalorder %s16, 0
    %p58 = por %p56, %p57
    %p59 = scmp.ne.s32.totalorder %s47, %s48
    %p60 = scmp.eq.s32.totalorder %s17, 1
    %p61 = por %p59, %p60
    %p63 = scmp.ne.s32.totalorder %s48, %s62
    %p64 = scmp.eq.s32.totalorder %s17, 0
    %p65 = por %p63, %p64
    %s67 = sadd.s32 %s66, 1
    %p70 = scmp.eq.s32.totalorder %s11, 1
    %p71 = scmp.ne.s32.totalorder %s66, %s68
    %p72 = scmp.eq.s32.totalorder %s11, 0
    %p73 = por %p71, %p72
    %p74 = scmp.ne.s32.totalorder %s66, %s68
    %p75 = scmp.eq.s32.totalorder %s16, 1
    %p76 = por %p74, %p75
    %p77 = scmp.ne.s32.totalorder %s68, %s69
    %p78 = scmp.eq.s32.totalorder %s16, 0
    %p79 = por %p77, %p78
    %p80 = scmp.ne.s32.totalorder %s68, %s69
    %p81 = scmp.eq.s32.totalorder %s17, 1
    %p82 = por %p80, %p81
    %p84 = scmp.ne.s32.totalorder %s69, %s83
    %p85 = scmp.eq.s32.totalorder %s17, 0
    %p86 = por %p84, %p85
    %s88 = sadd.s32 %s87, 1
    %p91 = scmp.eq.s32.totalorder %s11, 1
    %p92 = scmp.ne.s32.totalorder %s87, %s89
    %p93 = scmp.eq.s32.totalorder %s11, 0
    %p94 = por %p92, %p93
    %p95 = scmp.ne.s32.totalorder %s87, %s89
    %p96 = scmp.eq.s32.totalorder %s16, 1
    %p97 = por %p95, %p96
    %p98 = scmp.ne.s32.totalorder %s89, %s90
    %p99 = scmp.eq.s32.totalorder %s16, 0
    %p100 = por %p98, %p99
    %p101 = scmp.ne.s32.totalorder %s89, %s90
    %p102 = scmp.eq.s32.totalorder %s17, 1
    %p103 = por %p101, %p102
    %p105 = scmp.ne.s32.totalorder %s90, %s104
    %p106 = scmp.eq.s32.totalorder %s17, 0
    %p107 = por %p105, %p106
    %s109 = sadd.s32 %s108, 1
    %p112 = scmp.eq.s32.totalorder %s11, 1
    %p113 = scmp.ne.s32.totalorder %s108, %s110
    %p114 = scmp.eq.s32.totalorder %s11, 0
    %p115 = por %p113, %p114
    %p116 = scmp.ne.s32.totalorder %s108, %s110
    %p117 = scmp.eq.s32.totalorder %s16, 1
    %p118 = por %p116, %p117
    %p119 = scmp.ne.s32.totalorder %s110, %s111
    %p120 = scmp.eq.s32.totalorder %s16, 0
    %p121 = por %p119, %p120
    %p122 = scmp.ne.s32.totalorder %s110, %s111
    %p123 = scmp.eq.s32.totalorder %s17, 1
    %p124 = por %p122, %p123
    %p126 = scmp.ne.s32.totalorder %s111, %s125
    %p127 = scmp.eq.s32.totalorder %s17, 0
    %p128 = por %p126, %p127
    %s129 = ssub.s32 %s11, %s18
    %p130 = scmp.eq.s32.totalorder %s129, 0
    %s132 = sadd.s32 %s131, 1
    %s133 = scalar_select %p130, %s131, %s132
    %p136 = pneg %p130
    %p137 = scmp.eq.s32.totalorder %s11, 1
    %p138 = por %p136, %p137
    %p139 = scmp.ne.s32.totalorder %s131, %s134
    %p140 = scmp.eq.s32.totalorder %s11, 0
    %p141 = por %p139, %p140
    %p142 = scmp.ne.s32.totalorder %s131, %s134
    %p143 = scmp.eq.s32.totalorder %s16, 1
    %p144 = por %p142, %p143
    %p145 = scmp.ne.s32.totalorder %s134, %s135
    %p146 = scmp.eq.s32.totalorder %s16, 0
    %p147 = por %p145, %p146
    %p148 = scmp.ne.s32.totalorder %s134, %s135
    %p149 = scmp.eq.s32.totalorder %s17, 1
    %p150 = por %p148, %p149
    %p152 = scmp.ne.s32.totalorder %s135, %s151
    %p153 = scmp.eq.s32.totalorder %s17, 0
    %p154 = por %p152, %p153
    %p155 = scmp.le.s32.totalorder 1, %s11
    %p156 = scmp.lt.s32.totalorder %s11, 3
    %p157 = pnand %p155, %p156
    %p158 = pneg %p157
    // Predicated region
    $region9: #{grid_encoder_forward.1} parent=5 // pred_check
      _
    $region10: #{grid_encoder_forward.1} parent=5 // pred_check_branch
      %160 = sbr.rel (%p157) target = $region12
    $region11: #{grid_encoder_forward.1} parent=5 // pred_region
      %s161 = ssub.s32 %s11, 1
      // Predicated region
      $region13: #{grid_encoder_forward.1} parent=11 // pred_check
        %p162 = pneg %p58
      $region14: #{grid_encoder_forward.1} parent=11 // pred_check_branch
        %164 = sbr.rel (%p162) target = $region16
      $region15: #{grid_encoder_forward.1} parent=11 // pred_region
        _
      $region16: #{grid_encoder_forward.1} parent=11 // pred_fallthru
        _
      // Predicated region
      $region17: #{grid_encoder_forward.1} parent=11 // pred_check
        %p165 = pneg %p79
      $region18: #{grid_encoder_forward.1} parent=11 // pred_check_branch
        %167 = sbr.rel (%p165) target = $region20
      $region19: #{grid_encoder_forward.1} parent=11 // pred_region
        _
      $region20: #{grid_encoder_forward.1} parent=11 // pred_fallthru
        _
      // Predicated region
      $region21: #{grid_encoder_forward.1} parent=11 // pred_check
        %p168 = pneg %p100
      $region22: #{grid_encoder_forward.1} parent=11 // pred_check_branch
        %170 = sbr.rel (%p168) target = $region24
      $region23: #{grid_encoder_forward.1} parent=11 // pred_region
        _
      $region24: #{grid_encoder_forward.1} parent=11 // pred_fallthru
        _
      // Predicated region
      $region25: #{grid_encoder_forward.1} parent=11 // pred_check
        %p171 = pneg %p121
      $region26: #{grid_encoder_forward.1} parent=11 // pred_check_branch
        %173 = sbr.rel (%p171) target = $region28
      $region27: #{grid_encoder_forward.1} parent=11 // pred_region
        _
      $region28: #{grid_encoder_forward.1} parent=11 // pred_fallthru
        _
    $region12: #{grid_encoder_forward.1} parent=5 // pred_fallthru
      _
    %p174 = scmp.lt.s32.totalorder %s11, 2
    // Predicated region
    $region29: #{grid_encoder_forward.1} parent=5 // pred_check
      %p175 = pneg %p174
    $region30: #{grid_encoder_forward.1} parent=5 // pred_check_branch
      %177 = sbr.rel (%p175) target = $region32
    $region31: #{grid_encoder_forward.1} parent=5 // pred_region
      // Predicated region
      $region33: #{grid_encoder_forward.1} parent=31 // pred_check
        %p178 = pneg %p31
      $region34: #{grid_encoder_forward.1} parent=31 // pred_check_branch
        %180 = sbr.rel (%p178) target = $region36
      $region35: #{grid_encoder_forward.1} parent=31 // pred_region
        %p181 = scmp.lt.s32.totalorder %s11, 1
        %s182 = scalar_select %p181, %s11, 1
        %s183 = smul.addr %s182, 5
        %s184 = smul.addr %s183, 8
        %s185 = scalar_lea.vmem %s0, %s184
      $region36: #{grid_encoder_forward.1} parent=31 // pred_fallthru
        _
    $region32: #{grid_encoder_forward.1} parent=5 // pred_fallthru
      _
    %p186 = scmp.le.s32.totalorder 1, %s11
    %p187 = scmp.lt.s32.totalorder %s11, 3
    %p188 = pnand %p186, %p187
    %p189 = pneg %p188
    // Predicated region
    $region37: #{grid_encoder_forward.1} parent=5 // pred_check
      _
    $region38: #{grid_encoder_forward.1} parent=5 // pred_check_branch
      %191 = sbr.rel (%p188) target = $region40
    $region39: #{grid_encoder_forward.1} parent=5 // pred_region
      %s192 = ssub.s32 %s11, 1
      %p193 = scmp.lt.s32.totalorder %s16, 1
      %s194 = scalar_select %p193, %s16, 1
      %s195 = smul.addr %s194, 5
      %s196 = smul.addr %s195, 8
      %s197 = scalar_lea.vmem %s0, %s196
      %p198 = pneg %p37
      %p199 = pneg %p34
      %p200 = pneg %p58
      %p201 = pneg %p55
      %p202 = pneg %p79
      %p203 = pneg %p76
      %p204 = pneg %p100
      %p205 = pneg %p97
      %p206 = pneg %p121
      %p207 = pneg %p118
      %p208 = pneg %p147
      %p209 = pneg %p144
      %p210 = scmp.lt.s32.totalorder %s16, 1
      %s211 = scalar_select %p210, %s16, 1
      %s212 = smul.addr %s211, 3
      %s213 = smul.addr %s212, 8
      %s214 = scalar_lea.vmem %s5, %s213
      %p215 = scmp.lt.s32.totalorder %s16, 1
      %s216 = scalar_select %p215, %s16, 1
      %s217 = smul.addr %s216, 5
      %s218 = smul.addr %s217, 8
      %s219 = scalar_lea.vmem %s0, %s218
      %p220 = scmp.lt.s32.totalorder %s16, 1
      %s221 = scalar_select %p220, %s16, 1
      %s222 = smul.addr %s221, 3
      %s223 = smul.addr %s222, 8
      %s224 = scalar_lea.vmem %s5, %s223
      %v226 = vld [vmem:[%s219] sm:$0xff]
      %v227 = vld [vmem:[%s219 + $0x8] sm:$0xff]
      %v228 = vld [vmem:[%s219 + $0x10] sm:$0xff]
      %v229 = vld [vmem:[%s219 + $0x18] sm:$0xff]
      %234 = vrot.lane.b32.xlu0 %v226, 111
      %v235 = vpop.permute.xlu0 %234
      %236 = vrot.lane.b32.xlu0 %v227, 111
      %v237 = vpop.permute.xlu0 %236
      %238 = vrot.lane.b32.xlu0 %v228, 111
      %v239 = vpop.permute.xlu0 %238
      %240 = vrot.lane.b32.xlu0 %v229, 111
      %v241 = vpop.permute.xlu0 %240
      %vm242 = vcmask 908288
      %v243 = vsel %vm242, %v235, %v237
      %v244 = vsel %vm242, %v237, %v239
      %v245 = vsel %vm242, %v239, %v241
      %249 = vst [vmem:[#allocation2] sm:$0xff] %v243
      %250 = vst [vmem:[#allocation2 + $0x8] sm:$0xff] %v244
      %251 = vst [vmem:[#allocation2 + $0x10] sm:$0xff] %v245
      %v252 = vld [vmem:[%s219] sm:$0xff]
      %v253 = vld [vmem:[%s219 + $0x8] sm:$0xff]
      %v254 = vld [vmem:[%s219 + $0x10] sm:$0xff]
      %v255 = vld [vmem:[%s219 + $0x18] sm:$0xff]
      %260 = vrot.lane.b32.xlu0 %v252, 110
      %v261 = vpop.permute.xlu0 %260
      %262 = vrot.lane.b32.xlu0 %v253, 110
      %v263 = vpop.permute.xlu0 %262
      %264 = vrot.lane.b32.xlu0 %v254, 110
      %v265 = vpop.permute.xlu0 %264
      %266 = vrot.lane.b32.xlu0 %v255, 110
      %v267 = vpop.permute.xlu0 %266
      %vm268 = vcmask 900096
      %v269 = vsel %vm268, %v261, %v263
      %v270 = vsel %vm268, %v263, %v265
      %v271 = vsel %vm268, %v265, %v267
      %275 = vst [vmem:[#allocation2 + $0x18] sm:$0xff] %v269
      %276 = vst [vmem:[#allocation2 + $0x20] sm:$0xff] %v270
      %277 = vst [vmem:[#allocation2 + $0x28] sm:$0xff] %v271
      %v278 = vld [vmem:[%s219] sm:$0xff]
      %v279 = vld [vmem:[%s219 + $0x8] sm:$0xff]
      %v280 = vld [vmem:[%s219 + $0x10] sm:$0xff]
      %v281 = vld [vmem:[%s219 + $0x18] sm:$0xff]
      %286 = vrot.lane.b32.xlu0 %v278, 109
      %v287 = vpop.permute.xlu0 %286
      %288 = vrot.lane.b32.xlu0 %v279, 109
      %v289 = vpop.permute.xlu0 %288
      %290 = vrot.lane.b32.xlu0 %v280, 109
      %v291 = vpop.permute.xlu0 %290
      %292 = vrot.lane.b32.xlu0 %v281, 109
      %v293 = vpop.permute.xlu0 %292
      %vm294 = vcmask 891904
      %v295 = vsel %vm294, %v287, %v289
      %v296 = vsel %vm294, %v289, %v291
      %v297 = vsel %vm294, %v291, %v293
      %301 = vst [vmem:[#allocation2 + $0x30] sm:$0xff] %v295
      %302 = vst [vmem:[#allocation2 + $0x38] sm:$0xff] %v296
      %303 = vst [vmem:[#allocation2 + $0x40] sm:$0xff] %v297
      %v304 = vld [vmem:[%s219] sm:$0xff]
      %v305 = vld [vmem:[%s219 + $0x8] sm:$0xff]
      %v306 = vld [vmem:[%s219 + $0x10] sm:$0xff]
      %v307 = vld [vmem:[%s219 + $0x18] sm:$0xff]
      %312 = vrot.lane.b32.xlu0 %v304, 101
      %v313 = vpop.permute.xlu0 %312
      %314 = vrot.lane.b32.xlu0 %v305, 101
      %v315 = vpop.permute.xlu0 %314
      %316 = vrot.lane.b32.xlu0 %v306, 101
      %v317 = vpop.permute.xlu0 %316
      %318 = vrot.lane.b32.xlu0 %v307, 101
      %v319 = vpop.permute.xlu0 %318
      %vm320 = vcmask 826368
      %v321 = vsel %vm320, %v313, %v315
      %v322 = vsel %vm320, %v315, %v317
      %v323 = vsel %vm320, %v317, %v319
      %327 = vst [vmem:[#allocation2 + $0x48] sm:$0xff] %v321
      %328 = vst [vmem:[#allocation2 + $0x50] sm:$0xff] %v322
      %329 = vst [vmem:[#allocation2 + $0x58] sm:$0xff] %v323
      %v330 = vld [vmem:[%s219] sm:$0xff]
      %v331 = vld [vmem:[%s219 + $0x8] sm:$0xff]
      %v332 = vld [vmem:[%s219 + $0x10] sm:$0xff]
      %v333 = vld [vmem:[%s219 + $0x18] sm:$0xff]
      %338 = vrot.lane.b32.xlu0 %v330, 100
      %v339 = vpop.permute.xlu0 %338
      %340 = vrot.lane.b32.xlu0 %v331, 100
      %v341 = vpop.permute.xlu0 %340
      %342 = vrot.lane.b32.xlu0 %v332, 100
      %v343 = vpop.permute.xlu0 %342
      %344 = vrot.lane.b32.xlu0 %v333, 100
      %v345 = vpop.permute.xlu0 %344
      %vm346 = vcmask 818176
      %v347 = vsel %vm346, %v339, %v341
      %v348 = vsel %vm346, %v341, %v343
      %v349 = vsel %vm346, %v343, %v345
      %353 = vst [vmem:[#allocation2 + $0x60] sm:$0xff] %v347
      %354 = vst [vmem:[#allocation2 + $0x68] sm:$0xff] %v348
      %355 = vst [vmem:[#allocation2 + $0x70] sm:$0xff] %v349
      %v356 = vld [vmem:[%s219] sm:$0xff]
      %v357 = vld [vmem:[%s219 + $0x8] sm:$0xff]
      %v358 = vld [vmem:[%s219 + $0x10] sm:$0xff]
      %v359 = vld [vmem:[%s219 + $0x18] sm:$0xff]
      %364 = vrot.lane.b32.xlu0 %v356, 99
      %v365 = vpop.permute.xlu0 %364
      %366 = vrot.lane.b32.xlu0 %v357, 99
      %v367 = vpop.permute.xlu0 %366
      %368 = vrot.lane.b32.xlu0 %v358, 99
      %v369 = vpop.permute.xlu0 %368
      %370 = vrot.lane.b32.xlu0 %v359, 99
      %v371 = vpop.permute.xlu0 %370
      %vm372 = vcmask 809984
      %v373 = vsel %vm372, %v365, %v367
      %v374 = vsel %vm372, %v367, %v369
      %v375 = vsel %vm372, %v369, %v371
      %379 = vst [vmem:[#allocation2 + $0x78] sm:$0xff] %v373
      %380 = vst [vmem:[#allocation2 + $0x80] sm:$0xff] %v374
      %381 = vst [vmem:[#allocation2 + $0x88] sm:$0xff] %v375
      %v382 = vld [vmem:[%s219] sm:$0xff]
      %v383 = vld [vmem:[%s219 + $0x8] sm:$0xff]
      %v384 = vld [vmem:[%s219 + $0x10] sm:$0xff]
      %v385 = vld [vmem:[%s219 + $0x18] sm:$0xff]
      %390 = vrot.lane.b32.xlu0 %v382, 91
      %v391 = vpop.permute.xlu0 %390
      %392 = vrot.lane.b32.xlu0 %v383, 91
      %v393 = vpop.permute.xlu0 %392
      %394 = vrot.lane.b32.xlu0 %v384, 91
      %v395 = vpop.permute.xlu0 %394
      %396 = vrot.lane.b32.xlu0 %v385, 91
      %v397 = vpop.permute.xlu0 %396
      %vm398 = vcmask 744448
      %v399 = vsel %vm398, %v391, %v393
      %v400 = vsel %vm398, %v393, %v395
      %v401 = vsel %vm398, %v395, %v397
      %405 = vst [vmem:[#allocation2 + $0x90] sm:$0xff] %v399
      %406 = vst [vmem:[#allocation2 + $0x98] sm:$0xff] %v400
      %407 = vst [vmem:[#allocation2 + $0xa0] sm:$0xff] %v401
      %v408 = vld [vmem:[%s219] sm:$0xff]
      %v409 = vld [vmem:[%s219 + $0x8] sm:$0xff]
      %v410 = vld [vmem:[%s219 + $0x10] sm:$0xff]
      %v411 = vld [vmem:[%s219 + $0x18] sm:$0xff]
      %416 = vrot.lane.b32.xlu0 %v408, 90
      %v417 = vpop.permute.xlu0 %416
      %418 = vrot.lane.b32.xlu0 %v409, 90
      %v419 = vpop.permute.xlu0 %418
      %420 = vrot.lane.b32.xlu0 %v410, 90
      %v421 = vpop.permute.xlu0 %420
      %422 = vrot.lane.b32.xlu0 %v411, 90
      %v423 = vpop.permute.xlu0 %422
      %vm424 = vcmask 736256
      %v425 = vsel %vm424, %v417, %v419
      %v426 = vsel %vm424, %v419, %v421
      %v427 = vsel %vm424, %v421, %v423
      %431 = vst [vmem:[#allocation2 + $0xa8] sm:$0xff] %v425
      %432 = vst [vmem:[#allocation2 + $0xb0] sm:$0xff] %v426
      %433 = vst [vmem:[#allocation2 + $0xb8] sm:$0xff] %v427
      %v434 = vld [vmem:[%s219] sm:$0xff]
      %v435 = vld [vmem:[%s219 + $0x8] sm:$0xff]
      %v436 = vld [vmem:[%s219 + $0x10] sm:$0xff]
      %v437 = vld [vmem:[%s219 + $0x18] sm:$0xff]
      %442 = vrot.lane.b32.xlu0 %v434, 89
      %v443 = vpop.permute.xlu0 %442
      %444 = vrot.lane.b32.xlu0 %v435, 89
      %v445 = vpop.permute.xlu0 %444
      %446 = vrot.lane.b32.xlu0 %v436, 89
      %v447 = vpop.permute.xlu0 %446
      %448 = vrot.lane.b32.xlu0 %v437, 89
      %v449 = vpop.permute.xlu0 %448
      %vm450 = vcmask 728064
      %v451 = vsel %vm450, %v443, %v445
      %v452 = vsel %vm450, %v445, %v447
      %v453 = vsel %vm450, %v447, %v449
      %457 = vst [vmem:[#allocation2 + $0xc0] sm:$0xff] %v451
      %458 = vst [vmem:[#allocation2 + $0xc8] sm:$0xff] %v452
      %459 = vst [vmem:[#allocation2 + $0xd0] sm:$0xff] %v453
      %v460 = vld [vmem:[%s219] sm:$0xff]
      %v461 = vld [vmem:[%s219 + $0x8] sm:$0xff]
      %v462 = vld [vmem:[%s219 + $0x10] sm:$0xff]
      %v463 = vld [vmem:[%s219 + $0x18] sm:$0xff]
      %468 = vrot.lane.b32.xlu0 %v460, 11
      %v469 = vpop.permute.xlu0 %468
      %470 = vrot.lane.b32.xlu0 %v461, 11
      %v471 = vpop.permute.xlu0 %470
      %472 = vrot.lane.b32.xlu0 %v462, 11
      %v473 = vpop.permute.xlu0 %472
      %474 = vrot.lane.b32.xlu0 %v463, 11
      %v475 = vpop.permute.xlu0 %474
      %vm476 = vcmask 89088
      %v477 = vsel %vm476, %v469, %v471
      %v478 = vsel %vm476, %v471, %v473
      %v479 = vsel %vm476, %v473, %v475
      %483 = vst [vmem:[#allocation2 + $0xd8] sm:$0xff] %v477
      %484 = vst [vmem:[#allocation2 + $0xe0] sm:$0xff] %v478
      %485 = vst [vmem:[#allocation2 + $0xe8] sm:$0xff] %v479
      %v486 = vld [vmem:[%s219] sm:$0xff]
      %v487 = vld [vmem:[%s219 + $0x8] sm:$0xff]
      %v488 = vld [vmem:[%s219 + $0x10] sm:$0xff]
      %v489 = vld [vmem:[%s219 + $0x18] sm:$0xff]
      %494 = vrot.lane.b32.xlu0 %v486, 10
      %v495 = vpop.permute.xlu0 %494
      %496 = vrot.lane.b32.xlu0 %v487, 10
      %v497 = vpop.permute.xlu0 %496
      %498 = vrot.lane.b32.xlu0 %v488, 10
      %v499 = vpop.permute.xlu0 %498
      %500 = vrot.lane.b32.xlu0 %v489, 10
      %v501 = vpop.permute.xlu0 %500
      %vm502 = vcmask 80896
      %v503 = vsel %vm502, %v495, %v497
      %v504 = vsel %vm502, %v497, %v499
      %v505 = vsel %vm502, %v499, %v501
      %509 = vst [vmem:[#allocation2 + $0xf0] sm:$0xff] %v503
      %510 = vst [vmem:[#allocation2 + $0xf8] sm:$0xff] %v504
      %511 = vst [vmem:[#allocation2 + $0x100] sm:$0xff] %v505
      %v512 = vld [vmem:[%s219] sm:$0xff]
      %v513 = vld [vmem:[%s219 + $0x8] sm:$0xff]
      %v514 = vld [vmem:[%s219 + $0x10] sm:$0xff]
      %v515 = vld [vmem:[%s219 + $0x18] sm:$0xff]
      %520 = vrot.lane.b32.xlu0 %v512, 9
      %v521 = vpop.permute.xlu0 %520
      %522 = vrot.lane.b32.xlu0 %v513, 9
      %v523 = vpop.permute.xlu0 %522
      %524 = vrot.lane.b32.xlu0 %v514, 9
      %v525 = vpop.permute.xlu0 %524
      %526 = vrot.lane.b32.xlu0 %v515, 9
      %v527 = vpop.permute.xlu0 %526
      %vm528 = vcmask 72704
      %v529 = vsel %vm528, %v521, %v523
      %v530 = vsel %vm528, %v523, %v525
      %v531 = vsel %vm528, %v525, %v527
      %535 = vst [vmem:[#allocation2 + $0x108] sm:$0xff] %v529
      %536 = vst [vmem:[#allocation2 + $0x110] sm:$0xff] %v530
      %537 = vst [vmem:[#allocation2 + $0x118] sm:$0xff] %v531
      %v538 = vld [vmem:[%s219] sm:$0xff]
      %v539 = vld [vmem:[%s219 + $0x8] sm:$0xff]
      %v540 = vld [vmem:[%s219 + $0x10] sm:$0xff]
      %v541 = vld [vmem:[%s219 + $0x18] sm:$0xff]
      %546 = vrot.lane.b32.xlu0 %v538, 1
      %v547 = vpop.permute.xlu0 %546
      %548 = vrot.lane.b32.xlu0 %v539, 1
      %v549 = vpop.permute.xlu0 %548
      %550 = vrot.lane.b32.xlu0 %v540, 1
      %v551 = vpop.permute.xlu0 %550
      %552 = vrot.lane.b32.xlu0 %v541, 1
      %v553 = vpop.permute.xlu0 %552
      %vm554 = vcmask 7168
      %v555 = vsel %vm554, %v547, %v549
      %v556 = vsel %vm554, %v549, %v551
      %v557 = vsel %vm554, %v551, %v553
      %561 = vst [vmem:[#allocation2 + $0x120] sm:$0xff] %v555
      %562 = vst [vmem:[#allocation2 + $0x128] sm:$0xff] %v556
      %563 = vst [vmem:[#allocation2 + $0x130] sm:$0xff] %v557
      %v564 = vld [vmem:[%s219 + $0x8] sm:$0xff]
      %v565 = vld [vmem:[%s219 + $0x10] sm:$0xff]
      %v566 = vld [vmem:[%s219 + $0x18] sm:$0xff]
      %567 = vst [vmem:[#allocation2 + $0x138] sm:$0xff] %v564
      %568 = vst [vmem:[#allocation2 + $0x140] sm:$0xff] %v565
      %569 = vst [vmem:[#allocation2 + $0x148] sm:$0xff] %v566
      %v570 = vld [vmem:[%s219 + $0x8] sm:$0xff]
      %v571 = vld [vmem:[%s219 + $0x10] sm:$0xff]
      %v572 = vld [vmem:[%s219 + $0x18] sm:$0xff]
      %v573 = vld [vmem:[%s219 + $0x20] sm:$0xff]
      %578 = vrot.lane.b32.xlu0 %v570, 127
      %v579 = vpop.permute.xlu0 %578
      %580 = vrot.lane.b32.xlu0 %v571, 127
      %v581 = vpop.permute.xlu0 %580
      %582 = vrot.lane.b32.xlu0 %v572, 127
      %v583 = vpop.permute.xlu0 %582
      %584 = vrot.lane.b32.xlu0 %v573, 127
      %v585 = vpop.permute.xlu0 %584
      %vm586 = vcmask 1039360
      %v587 = vsel %vm586, %v579, %v581
      %v588 = vsel %vm586, %v581, %v583
      %v589 = vsel %vm586, %v583, %v585
      %593 = vst [vmem:[#allocation2 + $0x150] sm:$0xff] %v587
      %594 = vst [vmem:[#allocation2 + $0x158] sm:$0xff] %v588
      %595 = vst [vmem:[#allocation2 + $0x160] sm:$0xff] %v589
      %v596 = vld [vmem:[%s219 + $0x8] sm:$0xff]
      %v597 = vld [vmem:[%s219 + $0x10] sm:$0xff]
      %v598 = vld [vmem:[%s219 + $0x18] sm:$0xff]
      %v599 = vld [vmem:[%s219 + $0x20] sm:$0xff]
      %604 = vrot.lane.b32.xlu0 %v596, 119
      %v605 = vpop.permute.xlu0 %604
      %606 = vrot.lane.b32.xlu0 %v597, 119
      %v607 = vpop.permute.xlu0 %606
      %608 = vrot.lane.b32.xlu0 %v598, 119
      %v609 = vpop.permute.xlu0 %608
      %610 = vrot.lane.b32.xlu0 %v599, 119
      %v611 = vpop.permute.xlu0 %610
      %vm612 = vcmask 973824
      %v613 = vsel %vm612, %v605, %v607
      %v614 = vsel %vm612, %v607, %v609
      %v615 = vsel %vm612, %v609, %v611
      %619 = vst [vmem:[#allocation2 + $0x168] sm:$0xff] %v613
      %620 = vst [vmem:[#allocation2 + $0x170] sm:$0xff] %v614
      %621 = vst [vmem:[#allocation2 + $0x178] sm:$0xff] %v615
      %v622 = vld [vmem:[%s219 + $0x8] sm:$0xff]
      %v623 = vld [vmem:[%s219 + $0x10] sm:$0xff]
      %v624 = vld [vmem:[%s219 + $0x18] sm:$0xff]
      %v625 = vld [vmem:[%s219 + $0x20] sm:$0xff]
      %630 = vrot.lane.b32.xlu0 %v622, 118
      %v631 = vpop.permute.xlu0 %630
      %632 = vrot.lane.b32.xlu0 %v623, 118
      %v633 = vpop.permute.xlu0 %632
      %634 = vrot.lane.b32.xlu0 %v624, 118
      %v635 = vpop.permute.xlu0 %634
      %636 = vrot.lane.b32.xlu0 %v625, 118
      %v637 = vpop.permute.xlu0 %636
      %vm638 = vcmask 965632
      %v639 = vsel %vm638, %v631, %v633
      %v640 = vsel %vm638, %v633, %v635
      %v641 = vsel %vm638, %v635, %v637
      %645 = vst [vmem:[#allocation2 + $0x180] sm:$0xff] %v639
      %646 = vst [vmem:[#allocation2 + $0x188] sm:$0xff] %v640
      %647 = vst [vmem:[#allocation2 + $0x190] sm:$0xff] %v641
      %v648 = vld [vmem:[%s219 + $0x8] sm:$0xff]
      %v649 = vld [vmem:[%s219 + $0x10] sm:$0xff]
      %v650 = vld [vmem:[%s219 + $0x18] sm:$0xff]
      %v651 = vld [vmem:[%s219 + $0x20] sm:$0xff]
      %656 = vrot.lane.b32.xlu0 %v648, 117
      %v657 = vpop.permute.xlu0 %656
      %658 = vrot.lane.b32.xlu0 %v649, 117
      %v659 = vpop.permute.xlu0 %658
      %660 = vrot.lane.b32.xlu0 %v650, 117
      %v661 = vpop.permute.xlu0 %660
      %662 = vrot.lane.b32.xlu0 %v651, 117
      %v663 = vpop.permute.xlu0 %662
      %vm664 = vcmask 957440
      %v665 = vsel %vm664, %v657, %v659
      %v666 = vsel %vm664, %v659, %v661
      %v667 = vsel %vm664, %v661, %v663
      %671 = vst [vmem:[#allocation2 + $0x198] sm:$0xff] %v665
      %672 = vst [vmem:[#allocation2 + $0x1a0] sm:$0xff] %v666
      %673 = vst [vmem:[#allocation2 + $0x1a8] sm:$0xff] %v667
      %v674 = vld [vmem:[%s219 + $0x8] sm:$0xff]
      %v675 = vld [vmem:[%s219 + $0x10] sm:$0xff]
      %v676 = vld [vmem:[%s219 + $0x18] sm:$0xff]
      %v677 = vld [vmem:[%s219 + $0x20] sm:$0xff]
      %682 = vrot.lane.b32.xlu0 %v674, 39
      %v683 = vpop.permute.xlu0 %682
      %684 = vrot.lane.b32.xlu0 %v675, 39
      %v685 = vpop.permute.xlu0 %684
      %686 = vrot.lane.b32.xlu0 %v676, 39
      %v687 = vpop.permute.xlu0 %686
      %688 = vrot.lane.b32.xlu0 %v677, 39
      %v689 = vpop.permute.xlu0 %688
      %vm690 = vcmask 318464
      %v691 = vsel %vm690, %v683, %v685
      %v692 = vsel %vm690, %v685, %v687
      %v693 = vsel %vm690, %v687, %v689
      %697 = vst [vmem:[#allocation2 + $0x1b0] sm:$0xff] %v691
      %698 = vst [vmem:[#allocation2 + $0x1b8] sm:$0xff] %v692
      %699 = vst [vmem:[#allocation2 + $0x1c0] sm:$0xff] %v693
      %v700 = vld [vmem:[%s219 + $0x8] sm:$0xff]
      %v701 = vld [vmem:[%s219 + $0x10] sm:$0xff]
      %v702 = vld [vmem:[%s219 + $0x18] sm:$0xff]
      %v703 = vld [vmem:[%s219 + $0x20] sm:$0xff]
      %708 = vrot.lane.b32.xlu0 %v700, 38
      %v709 = vpop.permute.xlu0 %708
      %710 = vrot.lane.b32.xlu0 %v701, 38
      %v711 = vpop.permute.xlu0 %710
      %712 = vrot.lane.b32.xlu0 %v702, 38
      %v713 = vpop.permute.xlu0 %712
      %714 = vrot.lane.b32.xlu0 %v703, 38
      %v715 = vpop.permute.xlu0 %714
      %vm716 = vcmask 310272
      %v717 = vsel %vm716, %v709, %v711
      %v718 = vsel %vm716, %v711, %v713
      %v719 = vsel %vm716, %v713, %v715
      %723 = vst [vmem:[#allocation2 + $0x1c8] sm:$0xff] %v717
      %724 = vst [vmem:[#allocation2 + $0x1d0] sm:$0xff] %v718
      %725 = vst [vmem:[#allocation2 + $0x1d8] sm:$0xff] %v719
      %v726 = vld [vmem:[%s219 + $0x8] sm:$0xff]
      %v727 = vld [vmem:[%s219 + $0x10] sm:$0xff]
      %v728 = vld [vmem:[%s219 + $0x18] sm:$0xff]
      %v729 = vld [vmem:[%s219 + $0x20] sm:$0xff]
      %734 = vrot.lane.b32.xlu0 %v726, 37
      %v735 = vpop.permute.xlu0 %734
      %736 = vrot.lane.b32.xlu0 %v727, 37
      %v737 = vpop.permute.xlu0 %736
      %738 = vrot.lane.b32.xlu0 %v728, 37
      %v739 = vpop.permute.xlu0 %738
      %740 = vrot.lane.b32.xlu0 %v729, 37
      %v741 = vpop.permute.xlu0 %740
      %vm742 = vcmask 302080
      %v743 = vsel %vm742, %v735, %v737
      %v744 = vsel %vm742, %v737, %v739
      %v745 = vsel %vm742, %v739, %v741
      %749 = vst [vmem:[#allocation2 + $0x1e0] sm:$0xff] %v743
      %750 = vst [vmem:[#allocation2 + $0x1e8] sm:$0xff] %v744
      %751 = vst [vmem:[#allocation2 + $0x1f0] sm:$0xff] %v745
      %v752 = vld [vmem:[%s219 + $0x8] sm:$0xff]
      %v753 = vld [vmem:[%s219 + $0x10] sm:$0xff]
      %v754 = vld [vmem:[%s219 + $0x18] sm:$0xff]
      %v755 = vld [vmem:[%s219 + $0x20] sm:$0xff]
      %760 = vrot.lane.b32.xlu0 %v752, 29
      %v761 = vpop.permute.xlu0 %760
      %762 = vrot.lane.b32.xlu0 %v753, 29
      %v763 = vpop.permute.xlu0 %762
      %764 = vrot.lane.b32.xlu0 %v754, 29
      %v765 = vpop.permute.xlu0 %764
      %766 = vrot.lane.b32.xlu0 %v755, 29
      %v767 = vpop.permute.xlu0 %766
      %vm768 = vcmask 236544
      %v769 = vsel %vm768, %v761, %v763
      %v770 = vsel %vm768, %v763, %v765
      %v771 = vsel %vm768, %v765, %v767
      %775 = vst [vmem:[#allocation2 + $0x1f8] sm:$0xff] %v769
      %776 = vst [vmem:[#allocation2 + $0x200] sm:$0xff] %v770
      %777 = vst [vmem:[#allocation2 + $0x208] sm:$0xff] %v771
      %v778 = vld [vmem:[%s219 + $0x8] sm:$0xff]
      %v779 = vld [vmem:[%s219 + $0x10] sm:$0xff]
      %v780 = vld [vmem:[%s219 + $0x18] sm:$0xff]
      %v781 = vld [vmem:[%s219 + $0x20] sm:$0xff]
      %786 = vrot.lane.b32.xlu0 %v778, 28
      %v787 = vpop.permute.xlu0 %786
      %788 = vrot.lane.b32.xlu0 %v779, 28
      %v789 = vpop.permute.xlu0 %788
      %790 = vrot.lane.b32.xlu0 %v780, 28
      %v791 = vpop.permute.xlu0 %790
      %792 = vrot.lane.b32.xlu0 %v781, 28
      %v793 = vpop.permute.xlu0 %792
      %vm794 = vcmask 228352
      %v795 = vsel %vm794, %v787, %v789
      %v796 = vsel %vm794, %v789, %v791
      %v797 = vsel %vm794, %v791, %v793
      %801 = vst [vmem:[#allocation2 + $0x210] sm:$0xff] %v795
      %802 = vst [vmem:[#allocation2 + $0x218] sm:$0xff] %v796
      %803 = vst [vmem:[#allocation2 + $0x220] sm:$0xff] %v797
      %v804 = vld [vmem:[%s219 + $0x8] sm:$0xff]
      %v805 = vld [vmem:[%s219 + $0x10] sm:$0xff]
      %v806 = vld [vmem:[%s219 + $0x18] sm:$0xff]
      %v807 = vld [vmem:[%s219 + $0x20] sm:$0xff]
      %812 = vrot.lane.b32.xlu0 %v804, 27
      %v813 = vpop.permute.xlu0 %812
      %814 = vrot.lane.b32.xlu0 %v805, 27
      %v815 = vpop.permute.xlu0 %814
      %816 = vrot.lane.b32.xlu0 %v806, 27
      %v817 = vpop.permute.xlu0 %816
      %818 = vrot.lane.b32.xlu0 %v807, 27
      %v819 = vpop.permute.xlu0 %818
      %vm820 = vcmask 220160
      %v821 = vsel %vm820, %v813, %v815
      %v822 = vsel %vm820, %v815, %v817
      %v823 = vsel %vm820, %v817, %v819
      %827 = vst [vmem:[#allocation2 + $0x228] sm:$0xff] %v821
      %828 = vst [vmem:[#allocation2 + $0x230] sm:$0xff] %v822
      %829 = vst [vmem:[#allocation2 + $0x238] sm:$0xff] %v823
      %v830 = vld [vmem:[%s219 + $0x8] sm:$0xff]
      %v831 = vld [vmem:[%s219 + $0x10] sm:$0xff]
      %v832 = vld [vmem:[%s219 + $0x18] sm:$0xff]
      %v833 = vld [vmem:[%s219 + $0x20] sm:$0xff]
      %838 = vrot.lane.b32.xlu0 %v830, 19
      %v839 = vpop.permute.xlu0 %838
      %840 = vrot.lane.b32.xlu0 %v831, 19
      %v841 = vpop.permute.xlu0 %840
      %842 = vrot.lane.b32.xlu0 %v832, 19
      %v843 = vpop.permute.xlu0 %842
      %844 = vrot.lane.b32.xlu0 %v833, 19
      %v845 = vpop.permute.xlu0 %844
      %vm846 = vcmask 154624
      %v847 = vsel %vm846, %v839, %v841
      %v848 = vsel %vm846, %v841, %v843
      %v849 = vsel %vm846, %v843, %v845
      %853 = vst [vmem:[#allocation2 + $0x240] sm:$0xff] %v847
      %854 = vst [vmem:[#allocation2 + $0x248] sm:$0xff] %v848
      %855 = vst [vmem:[#allocation2 + $0x250] sm:$0xff] %v849
      %v856 = vld [vmem:[%s219 + $0x8] sm:$0xff]
      %v857 = vld [vmem:[%s219 + $0x10] sm:$0xff]
      %v858 = vld [vmem:[%s219 + $0x18] sm:$0xff]
      %v859 = vld [vmem:[%s219 + $0x20] sm:$0xff]
      %864 = vrot.lane.b32.xlu0 %v856, 18
      %v865 = vpop.permute.xlu0 %864
      %866 = vrot.lane.b32.xlu0 %v857, 18
      %v867 = vpop.permute.xlu0 %866
      %868 = vrot.lane.b32.xlu0 %v858, 18
      %v869 = vpop.permute.xlu0 %868
      %870 = vrot.lane.b32.xlu0 %v859, 18
      %v871 = vpop.permute.xlu0 %870
      %vm872 = vcmask 146432
      %v873 = vsel %vm872, %v865, %v867
      %v874 = vsel %vm872, %v867, %v869
      %v875 = vsel %vm872, %v869, %v871
      %879 = vst [vmem:[#allocation2 + $0x258] sm:$0xff] %v873
      %880 = vst [vmem:[#allocation2 + $0x260] sm:$0xff] %v874
      %881 = vst [vmem:[#allocation2 + $0x268] sm:$0xff] %v875
      %v882 = vld [vmem:[%s219 + $0x8] sm:$0xff]
      %v883 = vld [vmem:[%s219 + $0x10] sm:$0xff]
      %v884 = vld [vmem:[%s219 + $0x18] sm:$0xff]
      %v885 = vld [vmem:[%s219 + $0x20] sm:$0xff]
      %890 = vrot.lane.b32.xlu0 %v882, 17
      %v891 = vpop.permute.xlu0 %890
      %892 = vrot.lane.b32.xlu0 %v883, 17
      %v893 = vpop.permute.xlu0 %892
      %894 = vrot.lane.b32.xlu0 %v884, 17
      %v895 = vpop.permute.xlu0 %894
      %896 = vrot.lane.b32.xlu0 %v885, 17
      %v897 = vpop.permute.xlu0 %896
      %vm898 = vcmask 138240
      %v899 = vsel %vm898, %v891, %v893
      %v900 = vsel %vm898, %v893, %v895
      %v901 = vsel %vm898, %v895, %v897
      %905 = vst [vmem:[#allocation2 + $0x270] sm:$0xff] %v899
      %906 = vst [vmem:[#allocation2 + $0x278] sm:$0xff] %v900
      %907 = vst [vmem:[#allocation2 + $0x280] sm:$0xff] %v901
      %v908 = vld [vmem:[%s1] sm:$0xff]
      %v909 = vld [vmem:[#allocation2] sm:$0xff]
      %v910 = vld [vmem:[#allocation2 + $0x8] sm:$0xff]
      %v911 = vld [vmem:[#allocation2 + $0x10] sm:$0xff]
      %v912 = vld [vmem:[#allocation2 + $0x18] sm:$0xff]
      %v913 = vld [vmem:[#allocation2 + $0x20] sm:$0xff]
      %v914 = vld [vmem:[#allocation2 + $0x28] sm:$0xff]
      %v915 = vld [vmem:[#allocation2 + $0x30] sm:$0xff]
      %v916 = vld [vmem:[#allocation2 + $0x38] sm:$0xff]
      %v917 = vld [vmem:[#allocation2 + $0x40] sm:$0xff]
      %v918 = vld [vmem:[#allocation2 + $0x48] sm:$0xff]
      %v919 = vld [vmem:[#allocation2 + $0x50] sm:$0xff]
      %v920 = vld [vmem:[#allocation2 + $0x58] sm:$0xff]
      %v921 = vld [vmem:[#allocation2 + $0x60] sm:$0xff]
      %v922 = vld [vmem:[#allocation2 + $0x68] sm:$0xff]
      %v923 = vld [vmem:[#allocation2 + $0x70] sm:$0xff]
      %v924 = vld [vmem:[#allocation2 + $0x78] sm:$0xff]
      %v925 = vld [vmem:[#allocation2 + $0x80] sm:$0xff]
      %v926 = vld [vmem:[#allocation2 + $0x88] sm:$0xff]
      %v927 = vld [vmem:[#allocation2 + $0x90] sm:$0xff]
      %v928 = vld [vmem:[#allocation2 + $0x98] sm:$0xff]
      %v929 = vld [vmem:[#allocation2 + $0xa0] sm:$0xff]
      %v930 = vld [vmem:[#allocation2 + $0xa8] sm:$0xff]
      %v931 = vld [vmem:[#allocation2 + $0xb0] sm:$0xff]
      %v932 = vld [vmem:[#allocation2 + $0xb8] sm:$0xff]
      %v933 = vld [vmem:[#allocation2 + $0xc0] sm:$0xff]
      %v934 = vld [vmem:[#allocation2 + $0xc8] sm:$0xff]
      %v935 = vld [vmem:[#allocation2 + $0xd0] sm:$0xff]
      %v936 = vld [vmem:[#allocation2 + $0xd8] sm:$0xff]
      %v937 = vld [vmem:[#allocation2 + $0xe0] sm:$0xff]
      %v938 = vld [vmem:[#allocation2 + $0xe8] sm:$0xff]
      %v939 = vld [vmem:[#allocation2 + $0xf0] sm:$0xff]
      %v940 = vld [vmem:[#allocation2 + $0xf8] sm:$0xff]
      %v941 = vld [vmem:[#allocation2 + $0x100] sm:$0xff]
      %v942 = vld [vmem:[#allocation2 + $0x108] sm:$0xff]
      %v943 = vld [vmem:[#allocation2 + $0x110] sm:$0xff]
      %v944 = vld [vmem:[#allocation2 + $0x118] sm:$0xff]
      %v945 = vld [vmem:[#allocation2 + $0x120] sm:$0xff]
      %v946 = vld [vmem:[#allocation2 + $0x128] sm:$0xff]
      %v947 = vld [vmem:[#allocation2 + $0x130] sm:$0xff]
      %v948 = vld [vmem:[#allocation2 + $0x138] sm:$0xff]
      %v949 = vld [vmem:[#allocation2 + $0x140] sm:$0xff]
      %v950 = vld [vmem:[#allocation2 + $0x148] sm:$0xff]
      %v951 = vld [vmem:[#allocation2 + $0x150] sm:$0xff]
      %v952 = vld [vmem:[#allocation2 + $0x158] sm:$0xff]
      %v953 = vld [vmem:[#allocation2 + $0x160] sm:$0xff]
      %v954 = vld [vmem:[#allocation2 + $0x168] sm:$0xff]
      %v955 = vld [vmem:[#allocation2 + $0x170] sm:$0xff]
      %v956 = vld [vmem:[#allocation2 + $0x178] sm:$0xff]
      %v957 = vld [vmem:[#allocation2 + $0x180] sm:$0xff]
      %v958 = vld [vmem:[#allocation2 + $0x188] sm:$0xff]
      %v959 = vld [vmem:[#allocation2 + $0x190] sm:$0xff]
      %v960 = vld [vmem:[#allocation2 + $0x198] sm:$0xff]
      %v961 = vld [vmem:[#allocation2 + $0x1a0] sm:$0xff]
      %v962 = vld [vmem:[#allocation2 + $0x1a8] sm:$0xff]
      %v963 = vld [vmem:[#allocation2 + $0x1b0] sm:$0xff]
      %v964 = vld [vmem:[#allocation2 + $0x1b8] sm:$0xff]
      %v965 = vld [vmem:[#allocation2 + $0x1c0] sm:$0xff]
      %v966 = vld [vmem:[#allocation2 + $0x1c8] sm:$0xff]
      %v967 = vld [vmem:[#allocation2 + $0x1d0] sm:$0xff]
      %v968 = vld [vmem:[#allocation2 + $0x1d8] sm:$0xff]
      %v969 = vld [vmem:[#allocation2 + $0x1e0] sm:$0xff]
      %v970 = vld [vmem:[#allocation2 + $0x1e8] sm:$0xff]
      %v971 = vld [vmem:[#allocation2 + $0x1f0] sm:$0xff]
      %v972 = vld [vmem:[#allocation2 + $0x1f8] sm:$0xff]
      %v973 = vld [vmem:[#allocation2 + $0x200] sm:$0xff]
      %v974 = vld [vmem:[#allocation2 + $0x208] sm:$0xff]
      %v975 = vld [vmem:[#allocation2 + $0x210] sm:$0xff]
      %v976 = vld [vmem:[#allocation2 + $0x218] sm:$0xff]
      %v977 = vld [vmem:[#allocation2 + $0x220] sm:$0xff]
      %v978 = vld [vmem:[#allocation2 + $0x228] sm:$0xff]
      %v979 = vld [vmem:[#allocation2 + $0x230] sm:$0xff]
      %v980 = vld [vmem:[#allocation2 + $0x238] sm:$0xff]
      %v981 = vld [vmem:[#allocation2 + $0x240] sm:$0xff]
      %v982 = vld [vmem:[#allocation2 + $0x248] sm:$0xff]
      %v983 = vld [vmem:[#allocation2 + $0x250] sm:$0xff]
      %v984 = vld [vmem:[#allocation2 + $0x258] sm:$0xff]
      %v985 = vld [vmem:[#allocation2 + $0x260] sm:$0xff]
      %v986 = vld [vmem:[#allocation2 + $0x268] sm:$0xff]
      %v987 = vld [vmem:[#allocation2 + $0x270] sm:$0xff]
      %v988 = vld [vmem:[#allocation2 + $0x278] sm:$0xff]
      %v989 = vld [vmem:[#allocation2 + $0x280] sm:$0xff]
      %v990 = vpack.c.bf16 %v912, %v909
      %v991 = vpack.c.bf16 %v913, %v910
      %v992 = vpack.c.bf16 %v914, %v911
      %v993 = vpack.c.bf16 %v918, %v915
      %v994 = vpack.c.bf16 %v919, %v916
      %v995 = vpack.c.bf16 %v920, %v917
      %v996 = vpack.c.bf16 %v924, %v921
      %v997 = vpack.c.bf16 %v925, %v922
      %v998 = vpack.c.bf16 %v926, %v923
      %v999 = vpack.c.bf16 %v930, %v927
      %v1000 = vpack.c.bf16 %v931, %v928
      %v1001 = vpack.c.bf16 %v932, %v929
      %v1002 = vpack.c.bf16 %v936, %v933
      %v1003 = vpack.c.bf16 %v937, %v934
      %v1004 = vpack.c.bf16 %v938, %v935
      %v1005 = vpack.c.bf16 %v942, %v939
      %v1006 = vpack.c.bf16 %v943, %v940
      %v1007 = vpack.c.bf16 %v944, %v941
      %v1008 = vpack.c.bf16 %v948, %v945
      %v1009 = vpack.c.bf16 %v949, %v946
      %v1010 = vpack.c.bf16 %v950, %v947
      %v1011 = vpack.c.bf16 %v954, %v951
      %v1012 = vpack.c.bf16 %v955, %v952
      %v1013 = vpack.c.bf16 %v956, %v953
      %v1014 = vpack.c.bf16 %v960, %v957
      %v1015 = vpack.c.bf16 %v961, %v958
      %v1016 = vpack.c.bf16 %v962, %v959
      %v1017 = vpack.c.bf16 %v966, %v963
      %v1018 = vpack.c.bf16 %v967, %v964
      %v1019 = vpack.c.bf16 %v968, %v965
      %v1020 = vpack.c.bf16 %v972, %v969
      %v1021 = vpack.c.bf16 %v973, %v970
      %v1022 = vpack.c.bf16 %v974, %v971
      %v1023 = vpack.c.bf16 %v978, %v975
      %v1024 = vpack.c.bf16 %v979, %v976
      %v1025 = vpack.c.bf16 %v980, %v977
      %v1026 = vpack.c.bf16 %v984, %v981
      %v1027 = vpack.c.bf16 %v985, %v982
      %v1028 = vpack.c.bf16 %v986, %v983
      %v1029 = vpack.c.bf16 %v987, %v987
      %v1030 = vpack.c.bf16 %v988, %v988
      %v1031 = vpack.c.bf16 %v989, %v989
      %v1032 = vld [vmem:[%s2] sm:$0xff]
      %v1033 = vld [vmem:[%s2 + $0x8] sm:$0xff]
      %v1034 = vld [vmem:[%s2 + $0x10] sm:$0xff]
      %v1036 = vunpack.c.l.b16 %v908
      %v1037 = vunpack.c.h.b16 %v908
      %v1038 = vpack.c.b16 %v1036, %v1036
      %v1039 = vpack.c.b16 %v1037, %v1037
      %vm1041 = vcmask 719872
      %v1043 = vsel %vm1041, %v1039, 0
      %vm1045 = vcmask 1043456
      %v1047 = vsel %vm1045, %v1029, 0
      %v1050 = vsel %vm1045, %v1030, 0
      %v1053 = vsel %vm1045, %v1031, 0
      %1055 = vmatprep.subr.bf16.mxu0 %v991
      %1056 = vmatpush1.bf16.msra.mxu0 %v990
      %1057 = vmatprep.subr.bf16.mxu0 %v994
      %1058 = vmatpush1.bf16.msra.mxu0 %v993
      %1059 = vmatprep.subr.bf16.mxu0 %v997
      %1060 = vmatpush1.bf16.msra.mxu0 %v996
      %1061 = vmatprep.subr.bf16.mxu0 %v1000
      %1062 = vmatpush1.bf16.msra.mxu0 %v999
      %1063 = vmatprep.subr.bf16.mxu0 %v1003
      %1064 = vmatpush1.bf16.msra.mxu0 %v1002
      %1065 = vmatprep.subr.bf16.mxu0 %v1006
      %1066 = vmatpush1.bf16.msra.mxu0 %v1005
      %1067 = vmatprep.subr.bf16.mxu0 %v1009
      %1068 = vmatpush1.bf16.msra.mxu0 %v1008
      %1069 = vmatprep.subr.bf16.mxu0 %v1012
      %1070 = vmatpush1.bf16.msra.mxu0 %v1011
      %1071 = vmatprep.subr.bf16.mxu0 %v1015
      %1072 = vmatpush1.bf16.msra.mxu0 %v1014
      %1073 = vmatprep.subr.bf16.mxu0 %v1018
      %1074 = vmatpush1.bf16.msra.mxu0 %v1017
      %1075 = vmatprep.subr.bf16.mxu0 %v1021
      %1076 = vmatpush1.bf16.msra.mxu0 %v1020
      %1077 = vmatprep.subr.bf16.mxu0 %v1024
      %1078 = vmatpush1.bf16.msra.mxu0 %v1023
      %1079 = vmatprep.subr.bf16.mxu0 %v1027
      %1080 = vmatpush1.bf16.msra.mxu0 %v1026
      %1081 = vmatprep.subr.bf16.mxu0 %v1050
      %1082 = vmatpush1.bf16.msra.mxu0 %v1047
      %1083 = vmatprep.subr.bf16.mxu0 0
      %1084 = vmatpush1.bf16.msra.mxu0 0
      %1085 = vmatprep.subr.bf16.mxu0 0
      %1086 = vmatpush1.bf16.msra.mxu0 0
      %1087 = vmatprep.mubr.bf16.mxu0 %v1043
      %1088 = vmatmul.mubr.bf16.gmra.mrb[0].mxu0 %v1038
      %v1089 = vpop.f32.mrb[0].mxu0
      %v1090 = vadd.f32 %v1032, %v1089
      %v1091 = vpop.f32.mrb[0].mxu0
      %v1092 = vadd.f32 %v1033, %v1091
      %v1093 = vpop.f32.mrb[0].mxu0
      %v1094 = vpop.f32.mrb[0].mxu0
      %1095 = vdwg.mxu0
      %1096 = vmatprep.subr.bf16.mxu0 0
      %1097 = vmatpush1.bf16.msra.mxu0 %v992
      %1098 = vmatprep.subr.bf16.mxu0 0
      %1099 = vmatpush1.bf16.msra.mxu0 %v995
      %1100 = vmatprep.subr.bf16.mxu0 0
      %1101 = vmatpush1.bf16.msra.mxu0 %v998
      %1102 = vmatprep.subr.bf16.mxu0 0
      %1103 = vmatpush1.bf16.msra.mxu0 %v1001
      %1104 = vmatprep.subr.bf16.mxu0 0
      %1105 = vmatpush1.bf16.msra.mxu0 %v1004
      %1106 = vmatprep.subr.bf16.mxu0 0
      %1107 = vmatpush1.bf16.msra.mxu0 %v1007
      %1108 = vmatprep.subr.bf16.mxu0 0
      %1109 = vmatpush1.bf16.msra.mxu0 %v1010
      %1110 = vmatprep.subr.bf16.mxu0 0
      %1111 = vmatpush1.bf16.msra.mxu0 %v1013
      %1112 = vmatprep.subr.bf16.mxu0 0
      %1113 = vmatpush1.bf16.msra.mxu0 %v1016
      %1114 = vmatprep.subr.bf16.mxu0 0
      %1115 = vmatpush1.bf16.msra.mxu0 %v1019
      %1116 = vmatprep.subr.bf16.mxu0 0
      %1117 = vmatpush1.bf16.msra.mxu0 %v1022
      %1118 = vmatprep.subr.bf16.mxu0 0
      %1119 = vmatpush1.bf16.msra.mxu0 %v1025
      %1120 = vmatprep.subr.bf16.mxu0 0
      %1121 = vmatpush1.bf16.msra.mxu0 %v1028
      %1122 = vmatprep.subr.bf16.mxu0 0
      %1123 = vmatpush1.bf16.msra.mxu0 %v1053
      %1124 = vmatprep.subr.bf16.mxu0 0
      %1125 = vmatpush1.bf16.msra.mxu0 0
      %1126 = vmatprep.subr.bf16.mxu0 0
      %1127 = vmatpush1.bf16.msra.mxu0 0
      %1128 = vmatprep.mubr.bf16.mxu0 %v1043
      %1129 = vmatmul.mubr.bf16.gmra.mrb[0].mxu0 %v1038
      %v1130 = vpop.f32.mrb[0].mxu0
      %v1131 = vadd.f32 %v1034, %v1130
      %v1132 = vpop.f32.mrb[0].mxu0
      %v1133 = vpop.f32.mrb[0].mxu0
      %v1134 = vpop.f32.mrb[0].mxu0
      %1135 = vdwg.mxu0
      %v1136 = vmax.f32 %v1090, 0.0
      %v1137 = vmax.f32 %v1092, 0.0
      %v1138 = vmax.f32 %v1131, 0.0
      %v1139 = vlaneseq
      %v1140 = vand.u32 %v1139, 127
      %v1141 = vadd.s32 %v1140, 128
      %v1142 = vadd.s32 %v1140, 256
      %v1143 = vcvt.s32.f32 %v1140
      %v1144 = vcvt.s32.f32 %v1141
      %v1145 = vcvt.s32.f32 %v1142
      %v1146 = vadd.f32 %v1143, 111.0
      %v1147 = vadd.f32 %v1144, 111.0
      %v1148 = vadd.f32 %v1145, 111.0
      %v1149 = vadd.f32 %v1146, 0.5
      %v1150 = vadd.f32 %v1147, 0.5
      %v1151 = vadd.f32 %v1148, 0.5
      %v1152 = vmul.f32 %v1149, 0.01
      %v1153 = vmul.f32 %v1150, 0.01
      %v1154 = vmul.f32 %v1151, 0.01
      %v1155 = vfloor.f32 %v1152
      %v1156 = vfloor.f32 %v1153
      %v1157 = vfloor.f32 %v1154
      %v1158 = vmul.f32 %v1155, 100.0
      %v1159 = vmul.f32 %v1156, 100.0
      %v1160 = vmul.f32 %v1157, 100.0
      %v1161 = vsub.f32 %v1146, %v1158
      %v1162 = vsub.f32 %v1147, %v1159
      %v1163 = vsub.f32 %v1148, %v1160
      %v1164 = vadd.f32 %v1161, 0.5
      %v1165 = vadd.f32 %v1162, 0.5
      %v1166 = vadd.f32 %v1163, 0.5
      %v1167 = vmul.f32 %v1164, 0.1
      %v1168 = vmul.f32 %v1165, 0.1
      %v1169 = vmul.f32 %v1166, 0.1
      %v1170 = vfloor.f32 %v1167
      %v1171 = vfloor.f32 %v1168
      %v1172 = vfloor.f32 %v1169
      %v1173 = vmul.f32 %v1170, 10.0
      %v1174 = vmul.f32 %v1171, 10.0
      %v1175 = vmul.f32 %v1172, 10.0
      %v1176 = vsub.f32 %v1161, %v1173
      %v1177 = vsub.f32 %v1162, %v1174
      %v1178 = vsub.f32 %v1163, %v1175
      %vm1179 = vcmp.ge.f32.partialorder %v1155, 1.0
      %vm1180 = vcmp.ge.f32.partialorder %v1156, 1.0
      %vm1181 = vcmp.ge.f32.partialorder %v1157, 1.0
      %vm1182 = vcmp.le.f32.partialorder %v1155, 4.0
      %vm1183 = vcmp.le.f32.partialorder %v1156, 4.0
      %vm1184 = vcmp.le.f32.partialorder %v1157, 4.0
      %vm1185 = vmand %vm1179, %vm1182
      %vm1186 = vmand %vm1180, %vm1183
      %vm1187 = vmand %vm1181, %vm1184
      %vm1188 = vcmp.ge.f32.partialorder %v1170, 1.0
      %vm1189 = vcmp.ge.f32.partialorder %v1171, 1.0
      %vm1190 = vcmp.ge.f32.partialorder %v1172, 1.0
      %vm1191 = vmand %vm1185, %vm1188
      %vm1192 = vmand %vm1186, %vm1189
      %vm1193 = vmand %vm1187, %vm1190
      %vm1194 = vcmp.le.f32.partialorder %v1170, 8.0
      %vm1195 = vcmp.le.f32.partialorder %v1171, 8.0
      %vm1196 = vcmp.le.f32.partialorder %v1172, 8.0
      %vm1197 = vmand %vm1191, %vm1194
      %vm1198 = vmand %vm1192, %vm1195
      %vm1199 = vmand %vm1193, %vm1196
      %vm1200 = vcmp.ge.f32.partialorder %v1176, 1.0
      %vm1201 = vcmp.ge.f32.partialorder %v1177, 1.0
      %vm1202 = vcmp.ge.f32.partialorder %v1178, 1.0
      %vm1203 = vmand %vm1197, %vm1200
      %vm1204 = vmand %vm1198, %vm1201
      %vm1205 = vmand %vm1199, %vm1202
      %vm1206 = vcmp.le.f32.partialorder %v1176, 8.0
      %vm1207 = vcmp.le.f32.partialorder %v1177, 8.0
      %vm1208 = vcmp.le.f32.partialorder %v1178, 8.0
      %vm1209 = vmand %vm1203, %vm1206
      %vm1210 = vmand %vm1204, %vm1207
      %vm1211 = vmand %vm1205, %vm1208
      %v1212 = vsel %vm1209, 1, 0
      %v1213 = vsel %vm1210, 1, 0
      %v1214 = vsel %vm1211, 1, 0
      %vm1215 = vcmp.eq.s32.totalorder %v1212, 1
      %vm1216 = vcmp.eq.s32.totalorder %v1213, 1
      %vm1217 = vcmp.eq.s32.totalorder %v1214, 1
      %v1218 = vsel %vm1215, %v1136, 0.0
      %v1219 = vsel %vm1216, %v1137, 0.0
      %v1220 = vsel %vm1217, %v1138, 0.0
      %1221 = vst [vmem:[#allocation3] sm:$0xff] 0.0
      %1222 = vst [vmem:[#allocation3 + $0x20] sm:$0xff] 0.0
      %1223 = vst [vmem:[#allocation3 + $0x8] sm:$0xff] %v1218
      %1224 = vst [vmem:[#allocation3 + $0x10] sm:$0xff] %v1219
      %1225 = vst [vmem:[#allocation3 + $0x18] sm:$0xff] %v1220
      %v1226 = vld [vmem:[#allocation3] sm:$0xff]
      %v1227 = vld [vmem:[#allocation3 + $0x8] sm:$0xff]
      %v1228 = vld [vmem:[#allocation3 + $0x10] sm:$0xff]
      %v1229 = vld [vmem:[#allocation3 + $0x18] sm:$0xff]
      %1234 = vrot.lane.b32.xlu0 %v1226, 111
      %v1235 = vpop.permute.xlu0 %1234
      %1236 = vrot.lane.b32.xlu0 %v1227, 111
      %v1237 = vpop.permute.xlu0 %1236
      %1238 = vrot.lane.b32.xlu0 %v1228, 111
      %v1239 = vpop.permute.xlu0 %1238
      %1240 = vrot.lane.b32.xlu0 %v1229, 111
      %v1241 = vpop.permute.xlu0 %1240
      %v1242 = vsel %vm242, %v1235, %v1237
      %v1243 = vsel %vm242, %v1237, %v1239
      %v1244 = vsel %vm242, %v1239, %v1241
      %1248 = vst [vmem:[#allocation2] sm:$0xff] %v1242
      %1249 = vst [vmem:[#allocation2 + $0x8] sm:$0xff] %v1243
      %1250 = vst [vmem:[#allocation2 + $0x10] sm:$0xff] %v1244
      %v1251 = vld [vmem:[#allocation3] sm:$0xff]
      %v1252 = vld [vmem:[#allocation3 + $0x8] sm:$0xff]
      %v1253 = vld [vmem:[#allocation3 + $0x10] sm:$0xff]
      %v1254 = vld [vmem:[#allocation3 + $0x18] sm:$0xff]
      %1259 = vrot.lane.b32.xlu0 %v1251, 110
      %v1260 = vpop.permute.xlu0 %1259
      %1261 = vrot.lane.b32.xlu0 %v1252, 110
      %v1262 = vpop.permute.xlu0 %1261
      %1263 = vrot.lane.b32.xlu0 %v1253, 110
      %v1264 = vpop.permute.xlu0 %1263
      %1265 = vrot.lane.b32.xlu0 %v1254, 110
      %v1266 = vpop.permute.xlu0 %1265
      %v1267 = vsel %vm268, %v1260, %v1262
      %v1268 = vsel %vm268, %v1262, %v1264
      %v1269 = vsel %vm268, %v1264, %v1266
      %1273 = vst [vmem:[#allocation2 + $0x18] sm:$0xff] %v1267
      %1274 = vst [vmem:[#allocation2 + $0x20] sm:$0xff] %v1268
      %1275 = vst [vmem:[#allocation2 + $0x28] sm:$0xff] %v1269
      %v1276 = vld [vmem:[#allocation3] sm:$0xff]
      %v1277 = vld [vmem:[#allocation3 + $0x8] sm:$0xff]
      %v1278 = vld [vmem:[#allocation3 + $0x10] sm:$0xff]
      %v1279 = vld [vmem:[#allocation3 + $0x18] sm:$0xff]
      %1284 = vrot.lane.b32.xlu0 %v1276, 109
      %v1285 = vpop.permute.xlu0 %1284
      %1286 = vrot.lane.b32.xlu0 %v1277, 109
      %v1287 = vpop.permute.xlu0 %1286
      %1288 = vrot.lane.b32.xlu0 %v1278, 109
      %v1289 = vpop.permute.xlu0 %1288
      %1290 = vrot.lane.b32.xlu0 %v1279, 109
      %v1291 = vpop.permute.xlu0 %1290
      %v1292 = vsel %vm294, %v1285, %v1287
      %v1293 = vsel %vm294, %v1287, %v1289
      %v1294 = vsel %vm294, %v1289, %v1291
      %1298 = vst [vmem:[#allocation2 + $0x30] sm:$0xff] %v1292
      %1299 = vst [vmem:[#allocation2 + $0x38] sm:$0xff] %v1293
      %1300 = vst [vmem:[#allocation2 + $0x40] sm:$0xff] %v1294
      %v1301 = vld [vmem:[#allocation3] sm:$0xff]
      %v1302 = vld [vmem:[#allocation3 + $0x8] sm:$0xff]
      %v1303 = vld [vmem:[#allocation3 + $0x10] sm:$0xff]
      %v1304 = vld [vmem:[#allocation3 + $0x18] sm:$0xff]
      %1309 = vrot.lane.b32.xlu0 %v1301, 101
      %v1310 = vpop.permute.xlu0 %1309
      %1311 = vrot.lane.b32.xlu0 %v1302, 101
      %v1312 = vpop.permute.xlu0 %1311
      %1313 = vrot.lane.b32.xlu0 %v1303, 101
      %v1314 = vpop.permute.xlu0 %1313
      %1315 = vrot.lane.b32.xlu0 %v1304, 101
      %v1316 = vpop.permute.xlu0 %1315
      %v1317 = vsel %vm320, %v1310, %v1312
      %v1318 = vsel %vm320, %v1312, %v1314
      %v1319 = vsel %vm320, %v1314, %v1316
      %1323 = vst [vmem:[#allocation2 + $0x48] sm:$0xff] %v1317
      %1324 = vst [vmem:[#allocation2 + $0x50] sm:$0xff] %v1318
      %1325 = vst [vmem:[#allocation2 + $0x58] sm:$0xff] %v1319
      %v1326 = vld [vmem:[#allocation3] sm:$0xff]
      %v1327 = vld [vmem:[#allocation3 + $0x8] sm:$0xff]
      %v1328 = vld [vmem:[#allocation3 + $0x10] sm:$0xff]
      %v1329 = vld [vmem:[#allocation3 + $0x18] sm:$0xff]
      %1334 = vrot.lane.b32.xlu0 %v1326, 100
      %v1335 = vpop.permute.xlu0 %1334
      %1336 = vrot.lane.b32.xlu0 %v1327, 100
      %v1337 = vpop.permute.xlu0 %1336
      %1338 = vrot.lane.b32.xlu0 %v1328, 100
      %v1339 = vpop.permute.xlu0 %1338
      %1340 = vrot.lane.b32.xlu0 %v1329, 100
      %v1341 = vpop.permute.xlu0 %1340
      %v1342 = vsel %vm346, %v1335, %v1337
      %v1343 = vsel %vm346, %v1337, %v1339
      %v1344 = vsel %vm346, %v1339, %v1341
      %1348 = vst [vmem:[#allocation2 + $0x60] sm:$0xff] %v1342
      %1349 = vst [vmem:[#allocation2 + $0x68] sm:$0xff] %v1343
      %1350 = vst [vmem:[#allocation2 + $0x70] sm:$0xff] %v1344
      %v1351 = vld [vmem:[#allocation3] sm:$0xff]
      %v1352 = vld [vmem:[#allocation3 + $0x8] sm:$0xff]
      %v1353 = vld [vmem:[#allocation3 + $0x10] sm:$0xff]
      %v1354 = vld [vmem:[#allocation3 + $0x18] sm:$0xff]
      %1359 = vrot.lane.b32.xlu0 %v1351, 99
      %v1360 = vpop.permute.xlu0 %1359
      %1361 = vrot.lane.b32.xlu0 %v1352, 99
      %v1362 = vpop.permute.xlu0 %1361
      %1363 = vrot.lane.b32.xlu0 %v1353, 99
      %v1364 = vpop.permute.xlu0 %1363
      %1365 = vrot.lane.b32.xlu0 %v1354, 99
      %v1366 = vpop.permute.xlu0 %1365
      %v1367 = vsel %vm372, %v1360, %v1362
      %v1368 = vsel %vm372, %v1362, %v1364
      %v1369 = vsel %vm372, %v1364, %v1366
      %1373 = vst [vmem:[#allocation2 + $0x78] sm:$0xff] %v1367
      %1374 = vst [vmem:[#allocation2 + $0x80] sm:$0xff] %v1368
      %1375 = vst [vmem:[#allocation2 + $0x88] sm:$0xff] %v1369
      %v1376 = vld [vmem:[#allocation3] sm:$0xff]
      %v1377 = vld [vmem:[#allocation3 + $0x8] sm:$0xff]
      %v1378 = vld [vmem:[#allocation3 + $0x10] sm:$0xff]
      %v1379 = vld [vmem:[#allocation3 + $0x18] sm:$0xff]
      %1384 = vrot.lane.b32.xlu0 %v1376, 91
      %v1385 = vpop.permute.xlu0 %1384
      %1386 = vrot.lane.b32.xlu0 %v1377, 91
      %v1387 = vpop.permute.xlu0 %1386
      %1388 = vrot.lane.b32.xlu0 %v1378, 91
      %v1389 = vpop.permute.xlu0 %1388
      %1390 = vrot.lane.b32.xlu0 %v1379, 91
      %v1391 = vpop.permute.xlu0 %1390
      %v1392 = vsel %vm398, %v1385, %v1387
      %v1393 = vsel %vm398, %v1387, %v1389
      %v1394 = vsel %vm398, %v1389, %v1391
      %1398 = vst [vmem:[#allocation2 + $0x90] sm:$0xff] %v1392
      %1399 = vst [vmem:[#allocation2 + $0x98] sm:$0xff] %v1393
      %1400 = vst [vmem:[#allocation2 + $0xa0] sm:$0xff] %v1394
      %v1401 = vld [vmem:[#allocation3] sm:$0xff]
      %v1402 = vld [vmem:[#allocation3 + $0x8] sm:$0xff]
      %v1403 = vld [vmem:[#allocation3 + $0x10] sm:$0xff]
      %v1404 = vld [vmem:[#allocation3 + $0x18] sm:$0xff]
      %1409 = vrot.lane.b32.xlu0 %v1401, 90
      %v1410 = vpop.permute.xlu0 %1409
      %1411 = vrot.lane.b32.xlu0 %v1402, 90
      %v1412 = vpop.permute.xlu0 %1411
      %1413 = vrot.lane.b32.xlu0 %v1403, 90
      %v1414 = vpop.permute.xlu0 %1413
      %1415 = vrot.lane.b32.xlu0 %v1404, 90
      %v1416 = vpop.permute.xlu0 %1415
      %v1417 = vsel %vm424, %v1410, %v1412
      %v1418 = vsel %vm424, %v1412, %v1414
      %v1419 = vsel %vm424, %v1414, %v1416
      %1423 = vst [vmem:[#allocation2 + $0xa8] sm:$0xff] %v1417
      %1424 = vst [vmem:[#allocation2 + $0xb0] sm:$0xff] %v1418
      %1425 = vst [vmem:[#allocation2 + $0xb8] sm:$0xff] %v1419
      %v1426 = vld [vmem:[#allocation3] sm:$0xff]
      %v1427 = vld [vmem:[#allocation3 + $0x8] sm:$0xff]
      %v1428 = vld [vmem:[#allocation3 + $0x10] sm:$0xff]
      %v1429 = vld [vmem:[#allocation3 + $0x18] sm:$0xff]
      %1434 = vrot.lane.b32.xlu0 %v1426, 89
      %v1435 = vpop.permute.xlu0 %1434
      %1436 = vrot.lane.b32.xlu0 %v1427, 89
      %v1437 = vpop.permute.xlu0 %1436
      %1438 = vrot.lane.b32.xlu0 %v1428, 89
      %v1439 = vpop.permute.xlu0 %1438
      %1440 = vrot.lane.b32.xlu0 %v1429, 89
      %v1441 = vpop.permute.xlu0 %1440
      %v1442 = vsel %vm450, %v1435, %v1437
      %v1443 = vsel %vm450, %v1437, %v1439
      %v1444 = vsel %vm450, %v1439, %v1441
      %1448 = vst [vmem:[#allocation2 + $0xc0] sm:$0xff] %v1442
      %1449 = vst [vmem:[#allocation2 + $0xc8] sm:$0xff] %v1443
      %1450 = vst [vmem:[#allocation2 + $0xd0] sm:$0xff] %v1444
      %v1451 = vld [vmem:[#allocation3] sm:$0xff]
      %v1452 = vld [vmem:[#allocation3 + $0x8] sm:$0xff]
      %v1453 = vld [vmem:[#allocation3 + $0x10] sm:$0xff]
      %v1454 = vld [vmem:[#allocation3 + $0x18] sm:$0xff]
      %1459 = vrot.lane.b32.xlu0 %v1451, 11
      %v1460 = vpop.permute.xlu0 %1459
      %1461 = vrot.lane.b32.xlu0 %v1452, 11
      %v1462 = vpop.permute.xlu0 %1461
      %1463 = vrot.lane.b32.xlu0 %v1453, 11
      %v1464 = vpop.permute.xlu0 %1463
      %1465 = vrot.lane.b32.xlu0 %v1454, 11
      %v1466 = vpop.permute.xlu0 %1465
      %v1467 = vsel %vm476, %v1460, %v1462
      %v1468 = vsel %vm476, %v1462, %v1464
      %v1469 = vsel %vm476, %v1464, %v1466
      %1473 = vst [vmem:[#allocation2 + $0xd8] sm:$0xff] %v1467
      %1474 = vst [vmem:[#allocation2 + $0xe0] sm:$0xff] %v1468
      %1475 = vst [vmem:[#allocation2 + $0xe8] sm:$0xff] %v1469
      %v1476 = vld [vmem:[#allocation3] sm:$0xff]
      %v1477 = vld [vmem:[#allocation3 + $0x8] sm:$0xff]
      %v1478 = vld [vmem:[#allocation3 + $0x10] sm:$0xff]
      %v1479 = vld [vmem:[#allocation3 + $0x18] sm:$0xff]
      %1484 = vrot.lane.b32.xlu0 %v1476, 10
      %v1485 = vpop.permute.xlu0 %1484
      %1486 = vrot.lane.b32.xlu0 %v1477, 10
      %v1487 = vpop.permute.xlu0 %1486
      %1488 = vrot.lane.b32.xlu0 %v1478, 10
      %v1489 = vpop.permute.xlu0 %1488
      %1490 = vrot.lane.b32.xlu0 %v1479, 10
      %v1491 = vpop.permute.xlu0 %1490
      %v1492 = vsel %vm502, %v1485, %v1487
      %v1493 = vsel %vm502, %v1487, %v1489
      %v1494 = vsel %vm502, %v1489, %v1491
      %1498 = vst [vmem:[#allocation2 + $0xf0] sm:$0xff] %v1492
      %1499 = vst [vmem:[#allocation2 + $0xf8] sm:$0xff] %v1493
      %1500 = vst [vmem:[#allocation2 + $0x100] sm:$0xff] %v1494
      %v1501 = vld [vmem:[#allocation3] sm:$0xff]
      %v1502 = vld [vmem:[#allocation3 + $0x8] sm:$0xff]
      %v1503 = vld [vmem:[#allocation3 + $0x10] sm:$0xff]
      %v1504 = vld [vmem:[#allocation3 + $0x18] sm:$0xff]
      %1509 = vrot.lane.b32.xlu0 %v1501, 9
      %v1510 = vpop.permute.xlu0 %1509
      %1511 = vrot.lane.b32.xlu0 %v1502, 9
      %v1512 = vpop.permute.xlu0 %1511
      %1513 = vrot.lane.b32.xlu0 %v1503, 9
      %v1514 = vpop.permute.xlu0 %1513
      %1515 = vrot.lane.b32.xlu0 %v1504, 9
      %v1516 = vpop.permute.xlu0 %1515
      %v1517 = vsel %vm528, %v1510, %v1512
      %v1518 = vsel %vm528, %v1512, %v1514
      %v1519 = vsel %vm528, %v1514, %v1516
      %1523 = vst [vmem:[#allocation2 + $0x108] sm:$0xff] %v1517
      %1524 = vst [vmem:[#allocation2 + $0x110] sm:$0xff] %v1518
      %1525 = vst [vmem:[#allocation2 + $0x118] sm:$0xff] %v1519
      %v1526 = vld [vmem:[#allocation3] sm:$0xff]
      %v1527 = vld [vmem:[#allocation3 + $0x8] sm:$0xff]
      %v1528 = vld [vmem:[#allocation3 + $0x10] sm:$0xff]
      %v1529 = vld [vmem:[#allocation3 + $0x18] sm:$0xff]
      %1534 = vrot.lane.b32.xlu0 %v1526, 1
      %v1535 = vpop.permute.xlu0 %1534
      %1536 = vrot.lane.b32.xlu0 %v1527, 1
      %v1537 = vpop.permute.xlu0 %1536
      %1538 = vrot.lane.b32.xlu0 %v1528, 1
      %v1539 = vpop.permute.xlu0 %1538
      %1540 = vrot.lane.b32.xlu0 %v1529, 1
      %v1541 = vpop.permute.xlu0 %1540
      %v1542 = vsel %vm554, %v1535, %v1537
      %v1543 = vsel %vm554, %v1537, %v1539
      %v1544 = vsel %vm554, %v1539, %v1541
      %1548 = vst [vmem:[#allocation2 + $0x120] sm:$0xff] %v1542
      %1549 = vst [vmem:[#allocation2 + $0x128] sm:$0xff] %v1543
      %1550 = vst [vmem:[#allocation2 + $0x130] sm:$0xff] %v1544
      %v1551 = vld [vmem:[#allocation3 + $0x8] sm:$0xff]
      %v1552 = vld [vmem:[#allocation3 + $0x10] sm:$0xff]
      %v1553 = vld [vmem:[#allocation3 + $0x18] sm:$0xff]
      %1554 = vst [vmem:[#allocation2 + $0x138] sm:$0xff] %v1551
      %1555 = vst [vmem:[#allocation2 + $0x140] sm:$0xff] %v1552
      %1556 = vst [vmem:[#allocation2 + $0x148] sm:$0xff] %v1553
      %v1557 = vld [vmem:[#allocation3 + $0x8] sm:$0xff]
      %v1558 = vld [vmem:[#allocation3 + $0x10] sm:$0xff]
      %v1559 = vld [vmem:[#allocation3 + $0x18] sm:$0xff]
      %v1560 = vld [vmem:[#allocation3 + $0x20] sm:$0xff]
      %1565 = vrot.lane.b32.xlu0 %v1557, 127
      %v1566 = vpop.permute.xlu0 %1565
      %1567 = vrot.lane.b32.xlu0 %v1558, 127
      %v1568 = vpop.permute.xlu0 %1567
      %1569 = vrot.lane.b32.xlu0 %v1559, 127
      %v1570 = vpop.permute.xlu0 %1569
      %1571 = vrot.lane.b32.xlu0 %v1560, 127
      %v1572 = vpop.permute.xlu0 %1571
      %v1573 = vsel %vm586, %v1566, %v1568
      %v1574 = vsel %vm586, %v1568, %v1570
      %v1575 = vsel %vm586, %v1570, %v1572
      %1579 = vst [vmem:[#allocation2 + $0x150] sm:$0xff] %v1573
      %1580 = vst [vmem:[#allocation2 + $0x158] sm:$0xff] %v1574
      %1581 = vst [vmem:[#allocation2 + $0x160] sm:$0xff] %v1575
      %v1582 = vld [vmem:[#allocation3 + $0x8] sm:$0xff]
      %v1583 = vld [vmem:[#allocation3 + $0x10] sm:$0xff]
      %v1584 = vld [vmem:[#allocation3 + $0x18] sm:$0xff]
      %v1585 = vld [vmem:[#allocation3 + $0x20] sm:$0xff]
      %1590 = vrot.lane.b32.xlu0 %v1582, 119
      %v1591 = vpop.permute.xlu0 %1590
      %1592 = vrot.lane.b32.xlu0 %v1583, 119
      %v1593 = vpop.permute.xlu0 %1592
      %1594 = vrot.lane.b32.xlu0 %v1584, 119
      %v1595 = vpop.permute.xlu0 %1594
      %1596 = vrot.lane.b32.xlu0 %v1585, 119
      %v1597 = vpop.permute.xlu0 %1596
      %v1598 = vsel %vm612, %v1591, %v1593
      %v1599 = vsel %vm612, %v1593, %v1595
      %v1600 = vsel %vm612, %v1595, %v1597
      %1604 = vst [vmem:[#allocation2 + $0x168] sm:$0xff] %v1598
      %1605 = vst [vmem:[#allocation2 + $0x170] sm:$0xff] %v1599
      %1606 = vst [vmem:[#allocation2 + $0x178] sm:$0xff] %v1600
      %v1607 = vld [vmem:[#allocation3 + $0x8] sm:$0xff]
      %v1608 = vld [vmem:[#allocation3 + $0x10] sm:$0xff]
      %v1609 = vld [vmem:[#allocation3 + $0x18] sm:$0xff]
      %v1610 = vld [vmem:[#allocation3 + $0x20] sm:$0xff]
      %1615 = vrot.lane.b32.xlu0 %v1607, 118
      %v1616 = vpop.permute.xlu0 %1615
      %1617 = vrot.lane.b32.xlu0 %v1608, 118
      %v1618 = vpop.permute.xlu0 %1617
      %1619 = vrot.lane.b32.xlu0 %v1609, 118
      %v1620 = vpop.permute.xlu0 %1619
      %1621 = vrot.lane.b32.xlu0 %v1610, 118
      %v1622 = vpop.permute.xlu0 %1621
      %v1623 = vsel %vm638, %v1616, %v1618
      %v1624 = vsel %vm638, %v1618, %v1620
      %v1625 = vsel %vm638, %v1620, %v1622
      %1629 = vst [vmem:[#allocation2 + $0x180] sm:$0xff] %v1623
      %1630 = vst [vmem:[#allocation2 + $0x188] sm:$0xff] %v1624
      %1631 = vst [vmem:[#allocation2 + $0x190] sm:$0xff] %v1625
      %v1632 = vld [vmem:[#allocation3 + $0x8] sm:$0xff]
      %v1633 = vld [vmem:[#allocation3 + $0x10] sm:$0xff]
      %v1634 = vld [vmem:[#allocation3 + $0x18] sm:$0xff]
      %v1635 = vld [vmem:[#allocation3 + $0x20] sm:$0xff]
      %1640 = vrot.lane.b32.xlu0 %v1632, 117
      %v1641 = vpop.permute.xlu0 %1640
      %1642 = vrot.lane.b32.xlu0 %v1633, 117
      %v1643 = vpop.permute.xlu0 %1642
      %1644 = vrot.lane.b32.xlu0 %v1634, 117
      %v1645 = vpop.permute.xlu0 %1644
      %1646 = vrot.lane.b32.xlu0 %v1635, 117
      %v1647 = vpop.permute.xlu0 %1646
      %v1648 = vsel %vm664, %v1641, %v1643
      %v1649 = vsel %vm664, %v1643, %v1645
      %v1650 = vsel %vm664, %v1645, %v1647
      %1654 = vst [vmem:[#allocation2 + $0x198] sm:$0xff] %v1648
      %1655 = vst [vmem:[#allocation2 + $0x1a0] sm:$0xff] %v1649
      %1656 = vst [vmem:[#allocation2 + $0x1a8] sm:$0xff] %v1650
      %v1657 = vld [vmem:[#allocation3 + $0x8] sm:$0xff]
      %v1658 = vld [vmem:[#allocation3 + $0x10] sm:$0xff]
      %v1659 = vld [vmem:[#allocation3 + $0x18] sm:$0xff]
      %v1660 = vld [vmem:[#allocation3 + $0x20] sm:$0xff]
      %1665 = vrot.lane.b32.xlu0 %v1657, 39
      %v1666 = vpop.permute.xlu0 %1665
      %1667 = vrot.lane.b32.xlu0 %v1658, 39
      %v1668 = vpop.permute.xlu0 %1667
      %1669 = vrot.lane.b32.xlu0 %v1659, 39
      %v1670 = vpop.permute.xlu0 %1669
      %1671 = vrot.lane.b32.xlu0 %v1660, 39
      %v1672 = vpop.permute.xlu0 %1671
      %v1673 = vsel %vm690, %v1666, %v1668
      %v1674 = vsel %vm690, %v1668, %v1670
      %v1675 = vsel %vm690, %v1670, %v1672
      %1679 = vst [vmem:[#allocation2 + $0x1b0] sm:$0xff] %v1673
      %1680 = vst [vmem:[#allocation2 + $0x1b8] sm:$0xff] %v1674
      %1681 = vst [vmem:[#allocation2 + $0x1c0] sm:$0xff] %v1675
      %v1682 = vld [vmem:[#allocation3 + $0x8] sm:$0xff]
      %v1683 = vld [vmem:[#allocation3 + $0x10] sm:$0xff]
      %v1684 = vld [vmem:[#allocation3 + $0x18] sm:$0xff]
      %v1685 = vld [vmem:[#allocation3 + $0x20] sm:$0xff]
      %1690 = vrot.lane.b32.xlu0 %v1682, 38
      %v1691 = vpop.permute.xlu0 %1690
      %1692 = vrot.lane.b32.xlu0 %v1683, 38
      %v1693 = vpop.permute.xlu0 %1692
      %1694 = vrot.lane.b32.xlu0 %v1684, 38
      %v1695 = vpop.permute.xlu0 %1694
      %1696 = vrot.lane.b32.xlu0 %v1685, 38
      %v1697 = vpop.permute.xlu0 %1696
      %v1698 = vsel %vm716, %v1691, %v1693
      %v1699 = vsel %vm716, %v1693, %v1695
      %v1700 = vsel %vm716, %v1695, %v1697
      %1704 = vst [vmem:[#allocation2 + $0x1c8] sm:$0xff] %v1698
      %1705 = vst [vmem:[#allocation2 + $0x1d0] sm:$0xff] %v1699
      %1706 = vst [vmem:[#allocation2 + $0x1d8] sm:$0xff] %v1700
      %v1707 = vld [vmem:[#allocation3 + $0x8] sm:$0xff]
      %v1708 = vld [vmem:[#allocation3 + $0x10] sm:$0xff]
      %v1709 = vld [vmem:[#allocation3 + $0x18] sm:$0xff]
      %v1710 = vld [vmem:[#allocation3 + $0x20] sm:$0xff]
      %1715 = vrot.lane.b32.xlu0 %v1707, 37
      %v1716 = vpop.permute.xlu0 %1715
      %1717 = vrot.lane.b32.xlu0 %v1708, 37
      %v1718 = vpop.permute.xlu0 %1717
      %1719 = vrot.lane.b32.xlu0 %v1709, 37
      %v1720 = vpop.permute.xlu0 %1719
      %1721 = vrot.lane.b32.xlu0 %v1710, 37
      %v1722 = vpop.permute.xlu0 %1721
      %v1723 = vsel %vm742, %v1716, %v1718
      %v1724 = vsel %vm742, %v1718, %v1720
      %v1725 = vsel %vm742, %v1720, %v1722
      %1729 = vst [vmem:[#allocation2 + $0x1e0] sm:$0xff] %v1723
      %1730 = vst [vmem:[#allocation2 + $0x1e8] sm:$0xff] %v1724
      %1731 = vst [vmem:[#allocation2 + $0x1f0] sm:$0xff] %v1725
      %v1732 = vld [vmem:[#allocation3 + $0x8] sm:$0xff]
      %v1733 = vld [vmem:[#allocation3 + $0x10] sm:$0xff]
      %v1734 = vld [vmem:[#allocation3 + $0x18] sm:$0xff]
      %v1735 = vld [vmem:[#allocation3 + $0x20] sm:$0xff]
      %1740 = vrot.lane.b32.xlu0 %v1732, 29
      %v1741 = vpop.permute.xlu0 %1740
      %1742 = vrot.lane.b32.xlu0 %v1733, 29
      %v1743 = vpop.permute.xlu0 %1742
      %1744 = vrot.lane.b32.xlu0 %v1734, 29
      %v1745 = vpop.permute.xlu0 %1744
      %1746 = vrot.lane.b32.xlu0 %v1735, 29
      %v1747 = vpop.permute.xlu0 %1746
      %v1748 = vsel %vm768, %v1741, %v1743
      %v1749 = vsel %vm768, %v1743, %v1745
      %v1750 = vsel %vm768, %v1745, %v1747
      %1754 = vst [vmem:[#allocation2 + $0x1f8] sm:$0xff] %v1748
      %1755 = vst [vmem:[#allocation2 + $0x200] sm:$0xff] %v1749
      %1756 = vst [vmem:[#allocation2 + $0x208] sm:$0xff] %v1750
      %v1757 = vld [vmem:[#allocation3 + $0x8] sm:$0xff]
      %v1758 = vld [vmem:[#allocation3 + $0x10] sm:$0xff]
      %v1759 = vld [vmem:[#allocation3 + $0x18] sm:$0xff]
      %v1760 = vld [vmem:[#allocation3 + $0x20] sm:$0xff]
      %1765 = vrot.lane.b32.xlu0 %v1757, 28
      %v1766 = vpop.permute.xlu0 %1765
      %1767 = vrot.lane.b32.xlu0 %v1758, 28
      %v1768 = vpop.permute.xlu0 %1767
      %1769 = vrot.lane.b32.xlu0 %v1759, 28
      %v1770 = vpop.permute.xlu0 %1769
      %1771 = vrot.lane.b32.xlu0 %v1760, 28
      %v1772 = vpop.permute.xlu0 %1771
      %v1773 = vsel %vm794, %v1766, %v1768
      %v1774 = vsel %vm794, %v1768, %v1770
      %v1775 = vsel %vm794, %v1770, %v1772
      %1779 = vst [vmem:[#allocation2 + $0x210] sm:$0xff] %v1773
      %1780 = vst [vmem:[#allocation2 + $0x218] sm:$0xff] %v1774
      %1781 = vst [vmem:[#allocation2 + $0x220] sm:$0xff] %v1775
      %v1782 = vld [vmem:[#allocation3 + $0x8] sm:$0xff]
      %v1783 = vld [vmem:[#allocation3 + $0x10] sm:$0xff]
      %v1784 = vld [vmem:[#allocation3 + $0x18] sm:$0xff]
      %v1785 = vld [vmem:[#allocation3 + $0x20] sm:$0xff]
      %1790 = vrot.lane.b32.xlu0 %v1782, 27
      %v1791 = vpop.permute.xlu0 %1790
      %1792 = vrot.lane.b32.xlu0 %v1783, 27
      %v1793 = vpop.permute.xlu0 %1792
      %1794 = vrot.lane.b32.xlu0 %v1784, 27
      %v1795 = vpop.permute.xlu0 %1794
      %1796 = vrot.lane.b32.xlu0 %v1785, 27
      %v1797 = vpop.permute.xlu0 %1796
      %v1798 = vsel %vm820, %v1791, %v1793
      %v1799 = vsel %vm820, %v1793, %v1795
      %v1800 = vsel %vm820, %v1795, %v1797
      %1804 = vst [vmem:[#allocation2 + $0x228] sm:$0xff] %v1798
      %1805 = vst [vmem:[#allocation2 + $0x230] sm:$0xff] %v1799
      %1806 = vst [vmem:[#allocation2 + $0x238] sm:$0xff] %v1800
      %v1807 = vld [vmem:[#allocation3 + $0x8] sm:$0xff]
      %v1808 = vld [vmem:[#allocation3 + $0x10] sm:$0xff]
      %v1809 = vld [vmem:[#allocation3 + $0x18] sm:$0xff]
      %v1810 = vld [vmem:[#allocation3 + $0x20] sm:$0xff]
      %1815 = vrot.lane.b32.xlu0 %v1807, 19
      %v1816 = vpop.permute.xlu0 %1815
      %1817 = vrot.lane.b32.xlu0 %v1808, 19
      %v1818 = vpop.permute.xlu0 %1817
      %1819 = vrot.lane.b32.xlu0 %v1809, 19
      %v1820 = vpop.permute.xlu0 %1819
      %1821 = vrot.lane.b32.xlu0 %v1810, 19
      %v1822 = vpop.permute.xlu0 %1821
      %v1823 = vsel %vm846, %v1816, %v1818
      %v1824 = vsel %vm846, %v1818, %v1820
      %v1825 = vsel %vm846, %v1820, %v1822
      %1829 = vst [vmem:[#allocation2 + $0x240] sm:$0xff] %v1823
      %1830 = vst [vmem:[#allocation2 + $0x248] sm:$0xff] %v1824
      %1831 = vst [vmem:[#allocation2 + $0x250] sm:$0xff] %v1825
      %v1832 = vld [vmem:[#allocation3 + $0x8] sm:$0xff]
      %v1833 = vld [vmem:[#allocation3 + $0x10] sm:$0xff]
      %v1834 = vld [vmem:[#allocation3 + $0x18] sm:$0xff]
      %v1835 = vld [vmem:[#allocation3 + $0x20] sm:$0xff]
      %1840 = vrot.lane.b32.xlu0 %v1832, 18
      %v1841 = vpop.permute.xlu0 %1840
      %1842 = vrot.lane.b32.xlu0 %v1833, 18
      %v1843 = vpop.permute.xlu0 %1842
      %1844 = vrot.lane.b32.xlu0 %v1834, 18
      %v1845 = vpop.permute.xlu0 %1844
      %1846 = vrot.lane.b32.xlu0 %v1835, 18
      %v1847 = vpop.permute.xlu0 %1846
      %v1848 = vsel %vm872, %v1841, %v1843
      %v1849 = vsel %vm872, %v1843, %v1845
      %v1850 = vsel %vm872, %v1845, %v1847
      %1854 = vst [vmem:[#allocation2 + $0x258] sm:$0xff] %v1848
      %1855 = vst [vmem:[#allocation2 + $0x260] sm:$0xff] %v1849
      %1856 = vst [vmem:[#allocation2 + $0x268] sm:$0xff] %v1850
      %v1857 = vld [vmem:[#allocation3 + $0x8] sm:$0xff]
      %v1858 = vld [vmem:[#allocation3 + $0x10] sm:$0xff]
      %v1859 = vld [vmem:[#allocation3 + $0x18] sm:$0xff]
      %v1860 = vld [vmem:[#allocation3 + $0x20] sm:$0xff]
      %1865 = vrot.lane.b32.xlu0 %v1857, 17
      %v1866 = vpop.permute.xlu0 %1865
      %1867 = vrot.lane.b32.xlu0 %v1858, 17
      %v1868 = vpop.permute.xlu0 %1867
      %1869 = vrot.lane.b32.xlu0 %v1859, 17
      %v1870 = vpop.permute.xlu0 %1869
      %1871 = vrot.lane.b32.xlu0 %v1860, 17
      %v1872 = vpop.permute.xlu0 %1871
      %v1873 = vsel %vm898, %v1866, %v1868
      %v1874 = vsel %vm898, %v1868, %v1870
      %v1875 = vsel %vm898, %v1870, %v1872
      %1879 = vst [vmem:[#allocation2 + $0x270] sm:$0xff] %v1873
      %1880 = vst [vmem:[#allocation2 + $0x278] sm:$0xff] %v1874
      %1881 = vst [vmem:[#allocation2 + $0x280] sm:$0xff] %v1875
      %v1882 = vld [vmem:[%s3] sm:$0xff]
      %v1883 = vld [vmem:[#allocation2] sm:$0xff]
      %v1884 = vld [vmem:[#allocation2 + $0x8] sm:$0xff]
      %v1885 = vld [vmem:[#allocation2 + $0x10] sm:$0xff]
      %v1886 = vld [vmem:[#allocation2 + $0x18] sm:$0xff]
      %v1887 = vld [vmem:[#allocation2 + $0x20] sm:$0xff]
      %v1888 = vld [vmem:[#allocation2 + $0x28] sm:$0xff]
      %v1889 = vld [vmem:[#allocation2 + $0x30] sm:$0xff]
      %v1890 = vld [vmem:[#allocation2 + $0x38] sm:$0xff]
      %v1891 = vld [vmem:[#allocation2 + $0x40] sm:$0xff]
      %v1892 = vld [vmem:[#allocation2 + $0x48] sm:$0xff]
      %v1893 = vld [vmem:[#allocation2 + $0x50] sm:$0xff]
      %v1894 = vld [vmem:[#allocation2 + $0x58] sm:$0xff]
      %v1895 = vld [vmem:[#allocation2 + $0x60] sm:$0xff]
      %v1896 = vld [vmem:[#allocation2 + $0x68] sm:$0xff]
      %v1897 = vld [vmem:[#allocation2 + $0x70] sm:$0xff]
      %v1898 = vld [vmem:[#allocation2 + $0x78] sm:$0xff]
      %v1899 = vld [vmem:[#allocation2 + $0x80] sm:$0xff]
      %v1900 = vld [vmem:[#allocation2 + $0x88] sm:$0xff]
      %v1901 = vld [vmem:[#allocation2 + $0x90] sm:$0xff]
      %v1902 = vld [vmem:[#allocation2 + $0x98] sm:$0xff]
      %v1903 = vld [vmem:[#allocation2 + $0xa0] sm:$0xff]
      %v1904 = vld [vmem:[#allocation2 + $0xa8] sm:$0xff]
      %v1905 = vld [vmem:[#allocation2 + $0xb0] sm:$0xff]
      %v1906 = vld [vmem:[#allocation2 + $0xb8] sm:$0xff]
      %v1907 = vld [vmem:[#allocation2 + $0xc0] sm:$0xff]
      %v1908 = vld [vmem:[#allocation2 + $0xc8] sm:$0xff]
      %v1909 = vld [vmem:[#allocation2 + $0xd0] sm:$0xff]
      %v1910 = vld [vmem:[#allocation2 + $0xd8] sm:$0xff]
      %v1911 = vld [vmem:[#allocation2 + $0xe0] sm:$0xff]
      %v1912 = vld [vmem:[#allocation2 + $0xe8] sm:$0xff]
      %v1913 = vld [vmem:[#allocation2 + $0xf0] sm:$0xff]
      %v1914 = vld [vmem:[#allocation2 + $0xf8] sm:$0xff]
      %v1915 = vld [vmem:[#allocation2 + $0x100] sm:$0xff]
      %v1916 = vld [vmem:[#allocation2 + $0x108] sm:$0xff]
      %v1917 = vld [vmem:[#allocation2 + $0x110] sm:$0xff]
      %v1918 = vld [vmem:[#allocation2 + $0x118] sm:$0xff]
      %v1919 = vld [vmem:[#allocation2 + $0x120] sm:$0xff]
      %v1920 = vld [vmem:[#allocation2 + $0x128] sm:$0xff]
      %v1921 = vld [vmem:[#allocation2 + $0x130] sm:$0xff]
      %v1922 = vld [vmem:[#allocation2 + $0x138] sm:$0xff]
      %v1923 = vld [vmem:[#allocation2 + $0x140] sm:$0xff]
      %v1924 = vld [vmem:[#allocation2 + $0x148] sm:$0xff]
      %v1925 = vld [vmem:[#allocation2 + $0x150] sm:$0xff]
      %v1926 = vld [vmem:[#allocation2 + $0x158] sm:$0xff]
      %v1927 = vld [vmem:[#allocation2 + $0x160] sm:$0xff]
      %v1928 = vld [vmem:[#allocation2 + $0x168] sm:$0xff]
      %v1929 = vld [vmem:[#allocation2 + $0x170] sm:$0xff]
      %v1930 = vld [vmem:[#allocation2 + $0x178] sm:$0xff]
      %v1931 = vld [vmem:[#allocation2 + $0x180] sm:$0xff]
      %v1932 = vld [vmem:[#allocation2 + $0x188] sm:$0xff]
      %v1933 = vld [vmem:[#allocation2 + $0x190] sm:$0xff]
      %v1934 = vld [vmem:[#allocation2 + $0x198] sm:$0xff]
      %v1935 = vld [vmem:[#allocation2 + $0x1a0] sm:$0xff]
      %v1936 = vld [vmem:[#allocation2 + $0x1a8] sm:$0xff]
      %v1937 = vld [vmem:[#allocation2 + $0x1b0] sm:$0xff]
      %v1938 = vld [vmem:[#allocation2 + $0x1b8] sm:$0xff]
      %v1939 = vld [vmem:[#allocation2 + $0x1c0] sm:$0xff]
      %v1940 = vld [vmem:[#allocation2 + $0x1c8] sm:$0xff]
      %v1941 = vld [vmem:[#allocation2 + $0x1d0] sm:$0xff]
      %v1942 = vld [vmem:[#allocation2 + $0x1d8] sm:$0xff]
      %v1943 = vld [vmem:[#allocation2 + $0x1e0] sm:$0xff]
      %v1944 = vld [vmem:[#allocation2 + $0x1e8] sm:$0xff]
      %v1945 = vld [vmem:[#allocation2 + $0x1f0] sm:$0xff]
      %v1946 = vld [vmem:[#allocation2 + $0x1f8] sm:$0xff]
      %v1947 = vld [vmem:[#allocation2 + $0x200] sm:$0xff]
      %v1948 = vld [vmem:[#allocation2 + $0x208] sm:$0xff]
      %v1949 = vld [vmem:[#allocation2 + $0x210] sm:$0xff]
      %v1950 = vld [vmem:[#allocation2 + $0x218] sm:$0xff]
      %v1951 = vld [vmem:[#allocation2 + $0x220] sm:$0xff]
      %v1952 = vld [vmem:[#allocation2 + $0x228] sm:$0xff]
      %v1953 = vld [vmem:[#allocation2 + $0x230] sm:$0xff]
      %v1954 = vld [vmem:[#allocation2 + $0x238] sm:$0xff]
      %v1955 = vld [vmem:[#allocation2 + $0x240] sm:$0xff]
      %v1956 = vld [vmem:[#allocation2 + $0x248] sm:$0xff]
      %v1957 = vld [vmem:[#allocation2 + $0x250] sm:$0xff]
      %v1958 = vld [vmem:[#allocation2 + $0x258] sm:$0xff]
      %v1959 = vld [vmem:[#allocation2 + $0x260] sm:$0xff]
      %v1960 = vld [vmem:[#allocation2 + $0x268] sm:$0xff]
      %v1961 = vld [vmem:[#allocation2 + $0x270] sm:$0xff]
      %v1962 = vld [vmem:[#allocation2 + $0x278] sm:$0xff]
      %v1963 = vld [vmem:[#allocation2 + $0x280] sm:$0xff]
      %v1964 = vpack.c.bf16 %v1886, %v1883
      %v1965 = vpack.c.bf16 %v1887, %v1884
      %v1966 = vpack.c.bf16 %v1888, %v1885
      %v1967 = vpack.c.bf16 %v1892, %v1889
      %v1968 = vpack.c.bf16 %v1893, %v1890
      %v1969 = vpack.c.bf16 %v1894, %v1891
      %v1970 = vpack.c.bf16 %v1898, %v1895
      %v1971 = vpack.c.bf16 %v1899, %v1896
      %v1972 = vpack.c.bf16 %v1900, %v1897
      %v1973 = vpack.c.bf16 %v1904, %v1901
      %v1974 = vpack.c.bf16 %v1905, %v1902
      %v1975 = vpack.c.bf16 %v1906, %v1903
      %v1976 = vpack.c.bf16 %v1910, %v1907
      %v1977 = vpack.c.bf16 %v1911, %v1908
      %v1978 = vpack.c.bf16 %v1912, %v1909
      %v1979 = vpack.c.bf16 %v1916, %v1913
      %v1980 = vpack.c.bf16 %v1917, %v1914
      %v1981 = vpack.c.bf16 %v1918, %v1915
      %v1982 = vpack.c.bf16 %v1922, %v1919
      %v1983 = vpack.c.bf16 %v1923, %v1920
      %v1984 = vpack.c.bf16 %v1924, %v1921
      %v1985 = vpack.c.bf16 %v1928, %v1925
      %v1986 = vpack.c.bf16 %v1929, %v1926
      %v1987 = vpack.c.bf16 %v1930, %v1927
      %v1988 = vpack.c.bf16 %v1934, %v1931
      %v1989 = vpack.c.bf16 %v1935, %v1932
      %v1990 = vpack.c.bf16 %v1936, %v1933
      %v1991 = vpack.c.bf16 %v1940, %v1937
      %v1992 = vpack.c.bf16 %v1941, %v1938
      %v1993 = vpack.c.bf16 %v1942, %v1939
      %v1994 = vpack.c.bf16 %v1946, %v1943
      %v1995 = vpack.c.bf16 %v1947, %v1944
      %v1996 = vpack.c.bf16 %v1948, %v1945
      %v1997 = vpack.c.bf16 %v1952, %v1949
      %v1998 = vpack.c.bf16 %v1953, %v1950
      %v1999 = vpack.c.bf16 %v1954, %v1951
      %v2000 = vpack.c.bf16 %v1958, %v1955
      %v2001 = vpack.c.bf16 %v1959, %v1956
      %v2002 = vpack.c.bf16 %v1960, %v1957
      %v2003 = vpack.c.bf16 %v1961, %v1961
      %v2004 = vpack.c.bf16 %v1962, %v1962
      %v2005 = vpack.c.bf16 %v1963, %v1963
      %v2006 = vld [vmem:[%s4] sm:$0xff]
      %v2007 = vld [vmem:[%s4 + $0x8] sm:$0xff]
      %v2008 = vld [vmem:[%s4 + $0x10] sm:$0xff]
      %v2010 = vunpack.c.l.b16 %v1882
      %v2011 = vunpack.c.h.b16 %v1882
      %v2012 = vpack.c.b16 %v2010, %v2010
      %v2013 = vpack.c.b16 %v2011, %v2011
      %v2016 = vsel %vm1041, %v2013, 0
      %v2019 = vsel %vm1045, %v2003, 0
      %v2022 = vsel %vm1045, %v2004, 0
      %v2025 = vsel %vm1045, %v2005, 0
      %2027 = vmatprep.subr.bf16.mxu0 %v1965
      %2028 = vmatpush1.bf16.msra.mxu0 %v1964
      %2029 = vmatprep.subr.bf16.mxu0 %v1968
      %2030 = vmatpush1.bf16.msra.mxu0 %v1967
      %2031 = vmatprep.subr.bf16.mxu0 %v1971
      %2032 = vmatpush1.bf16.msra.mxu0 %v1970
      %2033 = vmatprep.subr.bf16.mxu0 %v1974
      %2034 = vmatpush1.bf16.msra.mxu0 %v1973
      %2035 = vmatprep.subr.bf16.mxu0 %v1977
      %2036 = vmatpush1.bf16.msra.mxu0 %v1976
      %2037 = vmatprep.subr.bf16.mxu0 %v1980
      %2038 = vmatpush1.bf16.msra.mxu0 %v1979
      %2039 = vmatprep.subr.bf16.mxu0 %v1983
      %2040 = vmatpush1.bf16.msra.mxu0 %v1982
      %2041 = vmatprep.subr.bf16.mxu0 %v1986
      %2042 = vmatpush1.bf16.msra.mxu0 %v1985
      %2043 = vmatprep.subr.bf16.mxu0 %v1989
      %2044 = vmatpush1.bf16.msra.mxu0 %v1988
      %2045 = vmatprep.subr.bf16.mxu0 %v1992
      %2046 = vmatpush1.bf16.msra.mxu0 %v1991
      %2047 = vmatprep.subr.bf16.mxu0 %v1995
      %2048 = vmatpush1.bf16.msra.mxu0 %v1994
      %2049 = vmatprep.subr.bf16.mxu0 %v1998
      %2050 = vmatpush1.bf16.msra.mxu0 %v1997
      %2051 = vmatprep.subr.bf16.mxu0 %v2001
      %2052 = vmatpush1.bf16.msra.mxu0 %v2000
      %2053 = vmatprep.subr.bf16.mxu0 %v2022
      %2054 = vmatpush1.bf16.msra.mxu0 %v2019
      %2055 = vmatprep.subr.bf16.mxu0 0
      %2056 = vmatpush1.bf16.msra.mxu0 0
      %2057 = vmatprep.subr.bf16.mxu0 0
      %2058 = vmatpush1.bf16.msra.mxu0 0
      %2059 = vmatprep.mubr.bf16.mxu0 %v2016
      %2060 = vmatmul.mubr.bf16.gmra.mrb[0].mxu0 %v2012
      %v2061 = vpop.f32.mrb[0].mxu0
      %v2062 = vadd.f32 %v2006, %v2061
      %v2063 = vpop.f32.mrb[0].mxu0
      %v2064 = vadd.f32 %v2007, %v2063
      %v2065 = vpop.f32.mrb[0].mxu0
      %v2066 = vpop.f32.mrb[0].mxu0
      %2067 = vdwg.mxu0
      %2068 = vmatprep.subr.bf16.mxu0 0
      %2069 = vmatpush1.bf16.msra.mxu0 %v1966
      %2070 = vmatprep.subr.bf16.mxu0 0
      %2071 = vmatpush1.bf16.msra.mxu0 %v1969
      %2072 = vmatprep.subr.bf16.mxu0 0
      %2073 = vmatpush1.bf16.msra.mxu0 %v1972
      %2074 = vmatprep.subr.bf16.mxu0 0
      %2075 = vmatpush1.bf16.msra.mxu0 %v1975
      %2076 = vmatprep.subr.bf16.mxu0 0
      %2077 = vmatpush1.bf16.msra.mxu0 %v1978
      %2078 = vmatprep.subr.bf16.mxu0 0
      %2079 = vmatpush1.bf16.msra.mxu0 %v1981
      %2080 = vmatprep.subr.bf16.mxu0 0
      %2081 = vmatpush1.bf16.msra.mxu0 %v1984
      %2082 = vmatprep.subr.bf16.mxu0 0
      %2083 = vmatpush1.bf16.msra.mxu0 %v1987
      %2084 = vmatprep.subr.bf16.mxu0 0
      %2085 = vmatpush1.bf16.msra.mxu0 %v1990
      %2086 = vmatprep.subr.bf16.mxu0 0
      %2087 = vmatpush1.bf16.msra.mxu0 %v1993
      %2088 = vmatprep.subr.bf16.mxu0 0
      %2089 = vmatpush1.bf16.msra.mxu0 %v1996
      %2090 = vmatprep.subr.bf16.mxu0 0
      %2091 = vmatpush1.bf16.msra.mxu0 %v1999
      %2092 = vmatprep.subr.bf16.mxu0 0
      %2093 = vmatpush1.bf16.msra.mxu0 %v2002
      %2094 = vmatprep.subr.bf16.mxu0 0
      %2095 = vmatpush1.bf16.msra.mxu0 %v2025
      %2096 = vmatprep.subr.bf16.mxu0 0
      %2097 = vmatpush1.bf16.msra.mxu0 0
      %2098 = vmatprep.subr.bf16.mxu0 0
      %2099 = vmatpush1.bf16.msra.mxu0 0
      %2100 = vmatprep.mubr.bf16.mxu0 %v2016
      %2101 = vmatmul.mubr.bf16.gmra.mrb[0].mxu0 %v2012
      %v2102 = vpop.f32.mrb[0].mxu0
      %v2103 = vadd.f32 %v2008, %v2102
      %v2104 = vpop.f32.mrb[0].mxu0
      %v2105 = vpop.f32.mrb[0].mxu0
      %v2106 = vpop.f32.mrb[0].mxu0
      %2107 = vdwg.mxu0
      %v2108 = vmax.f32 %v2062, 0.0
      %v2109 = vmax.f32 %v2064, 0.0
      %v2110 = vmax.f32 %v2103, 0.0
      %2111 = vst [vmem:[%s224] sm:$0xff] %v2108
      %2112 = vst [vmem:[%s224 + $0x8] sm:$0xff] %v2109
      %2113 = vst [vmem:[%s224 + $0x10] sm:$0xff] %v2110
      %p2114 = scmp.lt.s32.totalorder %s16, 1
      %s2115 = scalar_select %p2114, %s16, 1
      %s2116 = smul.addr %s2115, 3
      %s2117 = smul.addr %s2116, 8
      %s2118 = scalar_lea.vmem %s5, %s2117
      // Predicated region
      $region41: #{grid_encoder_forward.1} parent=39 // pred_check
        %p2119 = pneg %p144
      $region42: #{grid_encoder_forward.1} parent=39 // pred_check_branch
        %2121 = sbr.rel (%p2119) target = $region44
      $region43: #{grid_encoder_forward.1} parent=39 // pred_region
        _
      $region44: #{grid_encoder_forward.1} parent=39 // pred_fallthru
        _
    $region40: #{grid_encoder_forward.1} parent=5 // pred_fallthru
      _
    %p2122 = scmp.le.s32.totalorder 2, %s11
    // Predicated region
    $region45: #{grid_encoder_forward.1} parent=5 // pred_check
      %p2123 = pneg %p2122
    $region46: #{grid_encoder_forward.1} parent=5 // pred_check_branch
      %2125 = sbr.rel (%p2123) target = $region48
    $region47: #{grid_encoder_forward.1} parent=5 // pred_region
      %s2126 = ssub.s32 %s11, 2
      // Predicated region
      $region49: #{grid_encoder_forward.1} parent=47 // pred_check
        %p2127 = pneg %p150
      $region50: #{grid_encoder_forward.1} parent=47 // pred_check_branch
        %2129 = sbr.rel (%p2127) target = $region52
      $region51: #{grid_encoder_forward.1} parent=47 // pred_region
        %p2130 = scmp.lt.s32.totalorder %s17, 1
        %s2131 = scalar_select %p2130, %s17, 1
        %s2132 = smul.addr %s2131, 3
        %s2133 = smul.addr %s2132, 8
        %s2134 = scalar_lea.vmem %s5, %s2133
      $region52: #{grid_encoder_forward.1} parent=47 // pred_fallthru
        _
    $region48: #{grid_encoder_forward.1} parent=5 // pred_fallthru
      _
  $region6: #{grid_encoder_forward.1} parent=0 // loop_footer
    %s15 = sadd.s32 1, %s11
  $region7: #{grid_encoder_forward.1} parent=0 // loop_footer_branch
    %10 = sbr.rel target = $region3
  $region8: #{grid_encoder_forward.1} parent=0 // loop_exit
    _

</llo_original>
